<compile_context>
chip_gen: v5e
topology: v5e:2x2
jax: 0.10.0
libtpu: 0.0.40
codegen_flags: <defaults>
</compile_context>

<pallas_src>
import math

import jax
import jax.numpy as jnp
from jax import lax
from jax.experimental import pallas as pl
from jax.experimental.pallas import tpu as pltpu


def _make_kernel(num_heads):
    def kernel(rel_ref, q_ref, k_ref, v_ref, wq_ref, wk_ref, wv_ref,
               embT_ref, emb_ref, o_ref):
        # rel block: (1, TQ, S) int32; q/k/v blocks: (1, TQ, E);
        # weights: (E, E); embT: (E, R_pad); emb: (R_pad, E); out: (1, TQ, E).
        TQ = q_ref.shape[1]
        E = q_ref.shape[2]
        S = rel_ref.shape[2]
        R_pad = embT_ref.shape[1]
        H = num_heads
        D = E // H
        f32 = jnp.float32
        inv_sqrt_d = 1.0 / math.sqrt(D)

        # --- Projections on the MXU (PyTorch Linear: x @ W.T; weights pre-transposed).
        # Operands stay in the input dtype; accumulate in f32.
        q_proj = jnp.dot(q_ref[0], wq_ref[...], preferred_element_type=f32)   # (TQ, E)
        k_proj = jnp.dot(k_ref[0], wk_ref[...], preferred_element_type=f32)   # (TQ, E)
        v_proj = jnp.dot(v_ref[0], wv_ref[...], preferred_element_type=f32)   # (TQ, E)

        # --- One-hot of relation ids along a 128-lane-padded relation axis.
        rel = rel_ref[0]                                                      # (TQ, S) int32
        t_iota = lax.broadcasted_iota(jnp.int32, (TQ, S, R_pad), 2)
        onehot = (rel[:, :, None] == t_iota).astype(f32)                      # (TQ, S, R_pad)

        outs = []
        for h in range(H):          # static unroll, H is small
            sl = slice(h * D, (h + 1) * D)
            q_h = q_proj[:, sl]                                               # (TQ, D)
            k_h = k_proj[:, sl]
            v_h = v_proj[:, sl]

            # qe_h[i, t] = Q_h[i, :] · emb[t, head h]   (MXU: (TQ,D) x (D, R_pad=128))
            qe_h = jnp.dot(q_h, embT_ref[sl, :], preferred_element_type=f32)  # (TQ, R_pad)
            # diag_h[i] = Q_h[i, :] · K_h[i, :]   (module uses K at the query position i)
            diag_h = jnp.sum(q_h * k_h, axis=-1, keepdims=True)               # (TQ, 1)

            # scores_h[i, j] = (diag_h[i] + qe_h[i, rel[i, j]]) / sqrt(D); j on lanes.
            qr_h = jnp.sum(qe_h[:, None, :] * onehot, axis=-1)                # (TQ, S)
            scores_h = (diag_h + qr_h) * inv_sqrt_d                           # (TQ, S)

            # Softmax over j (lane axis).  dropout(p=0.0) is the identity.
            m_h = jnp.max(scores_h, axis=-1, keepdims=True)
            p_h = jnp.exp(scores_h - m_h)
            denom_h = jnp.sum(p_h, axis=-1, keepdims=True)
            alpha_h = p_h * pl.reciprocal(denom_h, approx=True)               # (TQ, S)

            # Since sum_j alpha == 1:
            #   z_h[i, :] = V_h[i, :] + sum_j alpha_h[i, j] * emb[rel[i, j], head h]
            # Aggregate alpha per relation id, then hit the tiny table on the MXU.
            A_h = jnp.sum(alpha_h[:, :, None] * onehot, axis=1)               # (TQ, R_pad)
            z_h = v_h + jnp.dot(A_h, emb_ref[:, sl], preferred_element_type=f32)  # (TQ, D)
            outs.append(z_h)

        # Single full-width store of the (TQ, E) slab.
        o_ref[0] = jnp.concatenate(outs, axis=-1).astype(o_ref.dtype)

    return kernel


def relation_aware_mha(query, key, value, relations, wq_t, wk_t, wv_t, emb,
                       num_heads, *, block_q=None, r_pad=128):
    """query/key/value: (B, S, E); relations: (B, S, S) int32; emb: (num_relations, E).

    wq_t/wk_t/wv_t are the nn.Linear weights pre-transposed (x @ W.T == x @ W_t).
    """
    B, S, E = query.shape
    H = num_heads
    assert E % H == 0, "embed_dim must be divisible by num_heads"
    R = emb.shape[0]
    assert R <= r_pad

    if block_q is None:
        block_q = S if S <= 128 else 128
    TQ = block_q
    assert S % TQ == 0

    # Tiny host-side relation tables (no (B,S,S,E) gather!):
    #   emb_pad:  (R_pad, E)  — embedding rows zero-padded to a lane-dense 128.
    #   embT_pad: (E, R_pad)  — transposed copy for the Q·emb matmul.
    emb_pad = jnp.zeros((r_pad, E), dtype=emb.dtype).at[:R].set(emb)
    embT_pad = emb_pad.T

    kernel = _make_kernel(H)
    out = pl.pallas_call(
        kernel,
        out_shape=jax.ShapeDtypeStruct((B, S, E), query.dtype),
        grid_spec=pltpu.PrefetchScalarGridSpec(
            num_scalar_prefetch=0,
            grid=(B, S // TQ),
            in_specs=[
                pl.BlockSpec((1, TQ, S), lambda b, qi: (b, qi, 0)),   # relations
                pl.BlockSpec((1, TQ, E), lambda b, qi: (b, qi, 0)),   # query
                pl.BlockSpec((1, TQ, E), lambda b, qi: (b, qi, 0)),   # key   (position i)
                pl.BlockSpec((1, TQ, E), lambda b, qi: (b, qi, 0)),   # value (position i)
                pl.BlockSpec((E, E), lambda b, qi: (0, 0)),           # W_Q^T
                pl.BlockSpec((E, E), lambda b, qi: (0, 0)),           # W_K^T
                pl.BlockSpec((E, E), lambda b, qi: (0, 0)),           # W_V^T
                pl.BlockSpec((E, r_pad), lambda b, qi: (0, 0)),       # emb^T (padded)
                pl.BlockSpec((r_pad, E), lambda b, qi: (0, 0)),       # emb   (padded)
            ],
            out_specs=pl.BlockSpec((1, TQ, E), lambda b, qi: (b, qi, 0)),
        ),
        compiler_params=pltpu.CompilerParams(
            dimension_semantics=("parallel", "parallel")),
    )(relations, query, key, value, wq_t, wk_t, wv_t, embT_pad, emb_pad)
    return out


def reference_mha(query, key, value, relations, wq_t, wk_t, wv_t, emb, num_heads):
    """Pure-JAX mirror of the PyTorch forward for validation."""
    B, S, E = query.shape
    H = num_heads
    D = E // H
    r = jnp.take(emb, relations, axis=0)                             # (B, S, S, E)
    Q = query @ wq_t
    K = key @ wk_t
    V = value @ wv_t
    Qh = Q.reshape(B, S, H, D)
    Kh = K.reshape(B, S, H, D)
    Vh = V.reshape(B, S, H, D)
    rh = r.reshape(B, S, S, H, D)
    diag = jnp.einsum("bihd,bihd->bhi", Qh, Kh)[..., None]           # (B, H, S, 1)
    qr = jnp.einsum("bihd,bijhd->bhij", Qh, rh)                      # (B, H, S, S)
    scores = (diag + qr) / math.sqrt(D)
    alpha = jax.nn.softmax(scores, axis=-1)
    vr = Vh[:, :, None, :, :] + rh                                   # (B, S, S, H, D)
    z = jnp.einsum("bhij,bijhd->bihd", alpha, vr)                    # (B, S, H, D)
    return z.reshape(B, S, E)


if __name__ == "__main__":
    B, S, E, H = 2, 8, 32, 4
    NUM_RELATIONS = 34

    key0 = jax.random.PRNGKey(0)
    ks = jax.random.split(key0, 8)

    query = jax.random.normal(ks[0], (B, S, E), dtype=jnp.float32)
    key_in = jax.random.normal(ks[1], (B, S, E), dtype=jnp.float32)
    value = jax.random.normal(ks[2], (B, S, E), dtype=jnp.float32)
    relations = jax.random.randint(ks[3], (B, S, S), 0, NUM_RELATIONS, dtype=jnp.int32)

    # Deterministic parameter init (synthetic; shapes match nn.Linear / nn.Embedding).
    bound = 1.0 / math.sqrt(E)
    W_Q = jax.random.uniform(ks[4], (E, E), minval=-bound, maxval=bound, dtype=jnp.float32)
    W_K = jax.random.uniform(ks[5], (E, E), minval=-bound, maxval=bound, dtype=jnp.float32)
    W_V = jax.random.uniform(ks[6], (E, E), minval=-bound, maxval=bound, dtype=jnp.float32)
    emb = jax.random.normal(ks[7], (NUM_RELATIONS, E), dtype=jnp.float32)

    # Pass the Linear weights pre-transposed (x @ W.T == x @ W_t).
    wq_t, wk_t, wv_t = W_Q.T, W_K.T, W_V.T

    out = relation_aware_mha(query, key_in, value, relations, wq_t, wk_t, wv_t, emb, H)
    out = jax.block_until_ready(out)

    ref = reference_mha(query, key_in, value, relations, wq_t, wk_t, wv_t, emb, H)
    assert out.shape == (B, S, E)
    # Tolerance accounts for the EUP approximate reciprocal in the softmax denominator.
    assert jnp.allclose(out, ref, rtol=2e-2, atol=2e-2), (
        f"mismatch: max abs err {jnp.max(jnp.abs(out - ref))}")

    print("KERNEL_OK")
</pallas_src>

<mosaic_0001>
module attributes {stable_mosaic.version = 11 : i64} {
  func.func @kernel(%arg0: i32, %arg1: i32, %arg2: memref<1x8x8xi32, #tpu.memory_space<vmem>>, %arg3: memref<1x8x32xf32, #tpu.memory_space<vmem>>, %arg4: memref<1x8x32xf32, #tpu.memory_space<vmem>>, %arg5: memref<1x8x32xf32, #tpu.memory_space<vmem>>, %arg6: memref<32x32xf32, #tpu.memory_space<vmem>>, %arg7: memref<32x32xf32, #tpu.memory_space<vmem>>, %arg8: memref<32x32xf32, #tpu.memory_space<vmem>>, %arg9: memref<32x128xf32, #tpu.memory_space<vmem>>, %arg10: memref<128x32xf32, #tpu.memory_space<vmem>>, %arg11: memref<1x8x32xf32, #tpu.memory_space<vmem>>) attributes {dimension_semantics = [#tpu.dimension_semantics<parallel>, #tpu.dimension_semantics<parallel>], iteration_bounds = array<i64: 2, 1>, scalar_prefetch = 0 : i64, scratch_operands = 0 : i64, tpu.core_type = #tpu.core_type<tc>, window_params = [{transform_indices = @transform_0, window_bounds = array<i64: 1, 8, 8>}, {transform_indices = @transform_1, window_bounds = array<i64: 1, 8, 32>}, {transform_indices = @transform_2, window_bounds = array<i64: 1, 8, 32>}, {transform_indices = @transform_3, window_bounds = array<i64: 1, 8, 32>}, {pipeline_mode = #tpu.pipeline_mode<synchronous>, transform_indices = @transform_4, window_bounds = array<i64: 32, 32>}, {pipeline_mode = #tpu.pipeline_mode<synchronous>, transform_indices = @transform_5, window_bounds = array<i64: 32, 32>}, {pipeline_mode = #tpu.pipeline_mode<synchronous>, transform_indices = @transform_6, window_bounds = array<i64: 32, 32>}, {pipeline_mode = #tpu.pipeline_mode<synchronous>, transform_indices = @transform_7, window_bounds = array<i64: 32, 128>}, {pipeline_mode = #tpu.pipeline_mode<synchronous>, transform_indices = @transform_8, window_bounds = array<i64: 128, 32>}, {transform_indices = @transform_9, window_bounds = array<i64: 1, 8, 32>}]} {
    %c0 = arith.constant 0 : index
    %c0_0 = arith.constant 0 : index
    %c0_1 = arith.constant 0 : index
    %0 = vector.load %arg3[%c0, %c0_0, %c0_1] : memref<1x8x32xf32, #tpu.memory_space<vmem>>, vector<1x8x32xf32>
    %1 = vector.shape_cast %0 : vector<1x8x32xf32> to vector<8x32xf32>
    %c0_2 = arith.constant 0 : index
    %c0_3 = arith.constant 0 : index
    %2 = vector.load %arg6[%c0_2, %c0_3] : memref<32x32xf32, #tpu.memory_space<vmem>>, vector<32x32xf32>
    %cst = arith.constant dense<0.000000e+00> : vector<8x32xf32>
    %3 = tpu.matmul %1, %2, %cst {dimension_numbers = #tpu.dot_dimension_numbers<[1], [0], [0], [1], [0, 0, 1, 1], [], []>} : vector<8x32xf32>, vector<32x32xf32>, vector<8x32xf32> -> vector<8x32xf32>
    %c0_4 = arith.constant 0 : index
    %c0_5 = arith.constant 0 : index
    %c0_6 = arith.constant 0 : index
    %4 = vector.load %arg4[%c0_4, %c0_5, %c0_6] : memref<1x8x32xf32, #tpu.memory_space<vmem>>, vector<1x8x32xf32>
    %5 = vector.shape_cast %4 : vector<1x8x32xf32> to vector<8x32xf32>
    %c0_7 = arith.constant 0 : index
    %c0_8 = arith.constant 0 : index
    %6 = vector.load %arg7[%c0_7, %c0_8] : memref<32x32xf32, #tpu.memory_space<vmem>>, vector<32x32xf32>
    %cst_9 = arith.constant dense<0.000000e+00> : vector<8x32xf32>
    %7 = tpu.matmul %5, %6, %cst_9 {dimension_numbers = #tpu.dot_dimension_numbers<[1], [0], [0], [1], [0, 0, 1, 1], [], []>} : vector<8x32xf32>, vector<32x32xf32>, vector<8x32xf32> -> vector<8x32xf32>
    %c0_10 = arith.constant 0 : index
    %c0_11 = arith.constant 0 : index
    %c0_12 = arith.constant 0 : index
    %8 = vector.load %arg5[%c0_10, %c0_11, %c0_12] : memref<1x8x32xf32, #tpu.memory_space<vmem>>, vector<1x8x32xf32>
    %9 = vector.shape_cast %8 : vector<1x8x32xf32> to vector<8x32xf32>
    %c0_13 = arith.constant 0 : index
    %c0_14 = arith.constant 0 : index
    %10 = vector.load %arg8[%c0_13, %c0_14] : memref<32x32xf32, #tpu.memory_space<vmem>>, vector<32x32xf32>
    %cst_15 = arith.constant dense<0.000000e+00> : vector<8x32xf32>
    %11 = tpu.matmul %9, %10, %cst_15 {dimension_numbers = #tpu.dot_dimension_numbers<[1], [0], [0], [1], [0, 0, 1, 1], [], []>} : vector<8x32xf32>, vector<32x32xf32>, vector<8x32xf32> -> vector<8x32xf32>
    %c0_16 = arith.constant 0 : index
    %c0_17 = arith.constant 0 : index
    %c0_18 = arith.constant 0 : index
    %12 = vector.load %arg2[%c0_16, %c0_17, %c0_18] : memref<1x8x8xi32, #tpu.memory_space<vmem>>, vector<1x8x8xi32>
    %13 = vector.shape_cast %12 : vector<1x8x8xi32> to vector<8x8xi32>
    %14 = tpu.iota {dimensions = array<i32: 2>} : vector<8x8x128xi32>
    %15 = vector.shape_cast %13 : vector<8x8xi32> to vector<8x8x1xi32>
    %16 = vector.broadcast %15 : vector<8x8x1xi32> to vector<8x8x128xi32>
    %17 = arith.cmpi eq, %16, %14 : vector<8x8x128xi32>
    %18 = arith.extui %17 : vector<8x8x128xi1> to vector<8x8x128xi32>
    %19 = arith.sitofp %18 : vector<8x8x128xi32> to vector<8x8x128xf32>
    %20 = vector.extract_strided_slice %3 {offsets = [0, 0], sizes = [8, 8], strides = [1, 1]} : vector<8x32xf32> to vector<8x8xf32>
    %21 = vector.extract_strided_slice %7 {offsets = [0, 0], sizes = [8, 8], strides = [1, 1]} : vector<8x32xf32> to vector<8x8xf32>
    %22 = vector.extract_strided_slice %11 {offsets = [0, 0], sizes = [8, 8], strides = [1, 1]} : vector<8x32xf32> to vector<8x8xf32>
    %c0_19 = arith.constant 0 : index
    %c0_20 = arith.constant 0 : index
    %23 = vector.load %arg9[%c0_19, %c0_20] : memref<32x128xf32, #tpu.memory_space<vmem>>, vector<8x128xf32>
    %cst_21 = arith.constant dense<0.000000e+00> : vector<8x128xf32>
    %24 = tpu.matmul %20, %23, %cst_21 {dimension_numbers = #tpu.dot_dimension_numbers<[1], [0], [0], [1], [0, 0, 1, 1], [], []>} : vector<8x8xf32>, vector<8x128xf32>, vector<8x128xf32> -> vector<8x128xf32>
    %25 = arith.mulf %20, %21 : vector<8x8xf32>
    %cst_22 = arith.constant dense<0.000000e+00> : vector<8xf32>
    %26 = vector.multi_reduction <add>, %25, %cst_22 [1] : vector<8x8xf32> to vector<8xf32>
    %27 = vector.shape_cast %26 : vector<8xf32> to vector<8x1xf32>
    %28 = vector.shape_cast %24 : vector<8x128xf32> to vector<8x1x128xf32>
    %29 = vector.broadcast %28 : vector<8x1x128xf32> to vector<8x8x128xf32>
    %30 = arith.mulf %29, %19 : vector<8x8x128xf32>
    %cst_23 = arith.constant dense<0.000000e+00> : vector<8x8xf32>
    %31 = vector.multi_reduction <add>, %30, %cst_23 [2] : vector<8x8x128xf32> to vector<8x8xf32>
    %32 = vector.broadcast %27 : vector<8x1xf32> to vector<8x8xf32>
    %33 = arith.addf %32, %31 : vector<8x8xf32>
    %cst_24 = arith.constant 0.353553385 : f32
    %34 = vector.broadcast %cst_24 : f32 to vector<8x8xf32>
    %35 = arith.mulf %33, %34 : vector<8x8xf32>
    %cst_25 = arith.constant dense<0xFF800000> : vector<8xf32>
    %36 = vector.multi_reduction <maximumf>, %35, %cst_25 [1] : vector<8x8xf32> to vector<8xf32>
    %37 = vector.shape_cast %36 : vector<8xf32> to vector<8x1xf32>
    %38 = vector.broadcast %37 : vector<8x1xf32> to vector<8x8xf32>
    %39 = arith.subf %35, %38 : vector<8x8xf32>
    %40 = math.exp %39 : vector<8x8xf32>
    %cst_26 = arith.constant dense<0.000000e+00> : vector<8xf32>
    %41 = vector.multi_reduction <add>, %40, %cst_26 [1] : vector<8x8xf32> to vector<8xf32>
    %42 = vector.shape_cast %41 : vector<8xf32> to vector<8x1xf32>
    %43 = tpu.reciprocal %42 {approx = true} : vector<8x1xf32> -> vector<8x1xf32>
    %44 = vector.broadcast %43 : vector<8x1xf32> to vector<8x8xf32>
    %45 = arith.mulf %40, %44 : vector<8x8xf32>
    %46 = vector.shape_cast %45 : vector<8x8xf32> to vector<8x8x1xf32>
    %47 = vector.broadcast %46 : vector<8x8x1xf32> to vector<8x8x128xf32>
    %48 = arith.mulf %47, %19 : vector<8x8x128xf32>
    %cst_27 = arith.constant dense<0.000000e+00> : vector<8x128xf32>
    %49 = vector.multi_reduction <add>, %48, %cst_27 [1] : vector<8x8x128xf32> to vector<8x128xf32>
    %c0_28 = arith.constant 0 : index
    %c0_29 = arith.constant 0 : index
    %50 = vector.load %arg10[%c0_28, %c0_29] : memref<128x32xf32, #tpu.memory_space<vmem>>, vector<128x8xf32>
    %cst_30 = arith.constant dense<0.000000e+00> : vector<8x8xf32>
    %51 = tpu.matmul %49, %50, %cst_30 {dimension_numbers = #tpu.dot_dimension_numbers<[1], [0], [0], [1], [0, 0, 1, 1], [], []>} : vector<8x128xf32>, vector<128x8xf32>, vector<8x8xf32> -> vector<8x8xf32>
    %52 = arith.addf %22, %51 : vector<8x8xf32>
    %53 = vector.extract_strided_slice %3 {offsets = [0, 8], sizes = [8, 8], strides = [1, 1]} : vector<8x32xf32> to vector<8x8xf32>
    %54 = vector.extract_strided_slice %7 {offsets = [0, 8], sizes = [8, 8], strides = [1, 1]} : vector<8x32xf32> to vector<8x8xf32>
    %55 = vector.extract_strided_slice %11 {offsets = [0, 8], sizes = [8, 8], strides = [1, 1]} : vector<8x32xf32> to vector<8x8xf32>
    %c8 = arith.constant 8 : index
    %c0_31 = arith.constant 0 : index
    %56 = vector.load %arg9[%c8, %c0_31] : memref<32x128xf32, #tpu.memory_space<vmem>>, vector<8x128xf32>
    %cst_32 = arith.constant dense<0.000000e+00> : vector<8x128xf32>
    %57 = tpu.matmul %53, %56, %cst_32 {dimension_numbers = #tpu.dot_dimension_numbers<[1], [0], [0], [1], [0, 0, 1, 1], [], []>} : vector<8x8xf32>, vector<8x128xf32>, vector<8x128xf32> -> vector<8x128xf32>
    %58 = arith.mulf %53, %54 : vector<8x8xf32>
    %cst_33 = arith.constant dense<0.000000e+00> : vector<8xf32>
    %59 = vector.multi_reduction <add>, %58, %cst_33 [1] : vector<8x8xf32> to vector<8xf32>
    %60 = vector.shape_cast %59 : vector<8xf32> to vector<8x1xf32>
    %61 = vector.shape_cast %57 : vector<8x128xf32> to vector<8x1x128xf32>
    %62 = vector.broadcast %61 : vector<8x1x128xf32> to vector<8x8x128xf32>
    %63 = arith.mulf %62, %19 : vector<8x8x128xf32>
    %cst_34 = arith.constant dense<0.000000e+00> : vector<8x8xf32>
    %64 = vector.multi_reduction <add>, %63, %cst_34 [2] : vector<8x8x128xf32> to vector<8x8xf32>
    %65 = vector.broadcast %60 : vector<8x1xf32> to vector<8x8xf32>
    %66 = arith.addf %65, %64 : vector<8x8xf32>
    %cst_35 = arith.constant 0.353553385 : f32
    %67 = vector.broadcast %cst_35 : f32 to vector<8x8xf32>
    %68 = arith.mulf %66, %67 : vector<8x8xf32>
    %cst_36 = arith.constant dense<0xFF800000> : vector<8xf32>
    %69 = vector.multi_reduction <maximumf>, %68, %cst_36 [1] : vector<8x8xf32> to vector<8xf32>
    %70 = vector.shape_cast %69 : vector<8xf32> to vector<8x1xf32>
    %71 = vector.broadcast %70 : vector<8x1xf32> to vector<8x8xf32>
    %72 = arith.subf %68, %71 : vector<8x8xf32>
    %73 = math.exp %72 : vector<8x8xf32>
    %cst_37 = arith.constant dense<0.000000e+00> : vector<8xf32>
    %74 = vector.multi_reduction <add>, %73, %cst_37 [1] : vector<8x8xf32> to vector<8xf32>
    %75 = vector.shape_cast %74 : vector<8xf32> to vector<8x1xf32>
    %76 = tpu.reciprocal %75 {approx = true} : vector<8x1xf32> -> vector<8x1xf32>
    %77 = vector.broadcast %76 : vector<8x1xf32> to vector<8x8xf32>
    %78 = arith.mulf %73, %77 : vector<8x8xf32>
    %79 = vector.shape_cast %78 : vector<8x8xf32> to vector<8x8x1xf32>
    %80 = vector.broadcast %79 : vector<8x8x1xf32> to vector<8x8x128xf32>
    %81 = arith.mulf %80, %19 : vector<8x8x128xf32>
    %cst_38 = arith.constant dense<0.000000e+00> : vector<8x128xf32>
    %82 = vector.multi_reduction <add>, %81, %cst_38 [1] : vector<8x8x128xf32> to vector<8x128xf32>
    %c0_39 = arith.constant 0 : index
    %c8_40 = arith.constant 8 : index
    %83 = vector.load %arg10[%c0_39, %c8_40] : memref<128x32xf32, #tpu.memory_space<vmem>>, vector<128x8xf32>
    %cst_41 = arith.constant dense<0.000000e+00> : vector<8x8xf32>
    %84 = tpu.matmul %82, %83, %cst_41 {dimension_numbers = #tpu.dot_dimension_numbers<[1], [0], [0], [1], [0, 0, 1, 1], [], []>} : vector<8x128xf32>, vector<128x8xf32>, vector<8x8xf32> -> vector<8x8xf32>
    %85 = arith.addf %55, %84 : vector<8x8xf32>
    %86 = vector.extract_strided_slice %3 {offsets = [0, 16], sizes = [8, 8], strides = [1, 1]} : vector<8x32xf32> to vector<8x8xf32>
    %87 = vector.extract_strided_slice %7 {offsets = [0, 16], sizes = [8, 8], strides = [1, 1]} : vector<8x32xf32> to vector<8x8xf32>
    %88 = vector.extract_strided_slice %11 {offsets = [0, 16], sizes = [8, 8], strides = [1, 1]} : vector<8x32xf32> to vector<8x8xf32>
    %c16 = arith.constant 16 : index
    %c0_42 = arith.constant 0 : index
    %89 = vector.load %arg9[%c16, %c0_42] : memref<32x128xf32, #tpu.memory_space<vmem>>, vector<8x128xf32>
    %cst_43 = arith.constant dense<0.000000e+00> : vector<8x128xf32>
    %90 = tpu.matmul %86, %89, %cst_43 {dimension_numbers = #tpu.dot_dimension_numbers<[1], [0], [0], [1], [0, 0, 1, 1], [], []>} : vector<8x8xf32>, vector<8x128xf32>, vector<8x128xf32> -> vector<8x128xf32>
    %91 = arith.mulf %86, %87 : vector<8x8xf32>
    %cst_44 = arith.constant dense<0.000000e+00> : vector<8xf32>
    %92 = vector.multi_reduction <add>, %91, %cst_44 [1] : vector<8x8xf32> to vector<8xf32>
    %93 = vector.shape_cast %92 : vector<8xf32> to vector<8x1xf32>
    %94 = vector.shape_cast %90 : vector<8x128xf32> to vector<8x1x128xf32>
    %95 = vector.broadcast %94 : vector<8x1x128xf32> to vector<8x8x128xf32>
    %96 = arith.mulf %95, %19 : vector<8x8x128xf32>
    %cst_45 = arith.constant dense<0.000000e+00> : vector<8x8xf32>
    %97 = vector.multi_reduction <add>, %96, %cst_45 [2] : vector<8x8x128xf32> to vector<8x8xf32>
    %98 = vector.broadcast %93 : vector<8x1xf32> to vector<8x8xf32>
    %99 = arith.addf %98, %97 : vector<8x8xf32>
    %cst_46 = arith.constant 0.353553385 : f32
    %100 = vector.broadcast %cst_46 : f32 to vector<8x8xf32>
    %101 = arith.mulf %99, %100 : vector<8x8xf32>
    %cst_47 = arith.constant dense<0xFF800000> : vector<8xf32>
    %102 = vector.multi_reduction <maximumf>, %101, %cst_47 [1] : vector<8x8xf32> to vector<8xf32>
    %103 = vector.shape_cast %102 : vector<8xf32> to vector<8x1xf32>
    %104 = vector.broadcast %103 : vector<8x1xf32> to vector<8x8xf32>
    %105 = arith.subf %101, %104 : vector<8x8xf32>
    %106 = math.exp %105 : vector<8x8xf32>
    %cst_48 = arith.constant dense<0.000000e+00> : vector<8xf32>
    %107 = vector.multi_reduction <add>, %106, %cst_48 [1] : vector<8x8xf32> to vector<8xf32>
    %108 = vector.shape_cast %107 : vector<8xf32> to vector<8x1xf32>
    %109 = tpu.reciprocal %108 {approx = true} : vector<8x1xf32> -> vector<8x1xf32>
    %110 = vector.broadcast %109 : vector<8x1xf32> to vector<8x8xf32>
    %111 = arith.mulf %106, %110 : vector<8x8xf32>
    %112 = vector.shape_cast %111 : vector<8x8xf32> to vector<8x8x1xf32>
    %113 = vector.broadcast %112 : vector<8x8x1xf32> to vector<8x8x128xf32>
    %114 = arith.mulf %113, %19 : vector<8x8x128xf32>
    %cst_49 = arith.constant dense<0.000000e+00> : vector<8x128xf32>
    %115 = vector.multi_reduction <add>, %114, %cst_49 [1] : vector<8x8x128xf32> to vector<8x128xf32>
    %c0_50 = arith.constant 0 : index
    %c16_51 = arith.constant 16 : index
    %116 = vector.load %arg10[%c0_50, %c16_51] : memref<128x32xf32, #tpu.memory_space<vmem>>, vector<128x8xf32>
    %cst_52 = arith.constant dense<0.000000e+00> : vector<8x8xf32>
    %117 = tpu.matmul %115, %116, %cst_52 {dimension_numbers = #tpu.dot_dimension_numbers<[1], [0], [0], [1], [0, 0, 1, 1], [], []>} : vector<8x128xf32>, vector<128x8xf32>, vector<8x8xf32> -> vector<8x8xf32>
    %118 = arith.addf %88, %117 : vector<8x8xf32>
    %119 = vector.extract_strided_slice %3 {offsets = [0, 24], sizes = [8, 8], strides = [1, 1]} : vector<8x32xf32> to vector<8x8xf32>
    %120 = vector.extract_strided_slice %7 {offsets = [0, 24], sizes = [8, 8], strides = [1, 1]} : vector<8x32xf32> to vector<8x8xf32>
    %121 = vector.extract_strided_slice %11 {offsets = [0, 24], sizes = [8, 8], strides = [1, 1]} : vector<8x32xf32> to vector<8x8xf32>
    %c24 = arith.constant 24 : index
    %c0_53 = arith.constant 0 : index
    %122 = vector.load %arg9[%c24, %c0_53] : memref<32x128xf32, #tpu.memory_space<vmem>>, vector<8x128xf32>
    %cst_54 = arith.constant dense<0.000000e+00> : vector<8x128xf32>
    %123 = tpu.matmul %119, %122, %cst_54 {dimension_numbers = #tpu.dot_dimension_numbers<[1], [0], [0], [1], [0, 0, 1, 1], [], []>} : vector<8x8xf32>, vector<8x128xf32>, vector<8x128xf32> -> vector<8x128xf32>
    %124 = arith.mulf %119, %120 : vector<8x8xf32>
    %cst_55 = arith.constant dense<0.000000e+00> : vector<8xf32>
    %125 = vector.multi_reduction <add>, %124, %cst_55 [1] : vector<8x8xf32> to vector<8xf32>
    %126 = vector.shape_cast %125 : vector<8xf32> to vector<8x1xf32>
    %127 = vector.shape_cast %123 : vector<8x128xf32> to vector<8x1x128xf32>
    %128 = vector.broadcast %127 : vector<8x1x128xf32> to vector<8x8x128xf32>
    %129 = arith.mulf %128, %19 : vector<8x8x128xf32>
    %cst_56 = arith.constant dense<0.000000e+00> : vector<8x8xf32>
    %130 = vector.multi_reduction <add>, %129, %cst_56 [2] : vector<8x8x128xf32> to vector<8x8xf32>
    %131 = vector.broadcast %126 : vector<8x1xf32> to vector<8x8xf32>
    %132 = arith.addf %131, %130 : vector<8x8xf32>
    %cst_57 = arith.constant 0.353553385 : f32
    %133 = vector.broadcast %cst_57 : f32 to vector<8x8xf32>
    %134 = arith.mulf %132, %133 : vector<8x8xf32>
    %cst_58 = arith.constant dense<0xFF800000> : vector<8xf32>
    %135 = vector.multi_reduction <maximumf>, %134, %cst_58 [1] : vector<8x8xf32> to vector<8xf32>
    %136 = vector.shape_cast %135 : vector<8xf32> to vector<8x1xf32>
    %137 = vector.broadcast %136 : vector<8x1xf32> to vector<8x8xf32>
    %138 = arith.subf %134, %137 : vector<8x8xf32>
    %139 = math.exp %138 : vector<8x8xf32>
    %cst_59 = arith.constant dense<0.000000e+00> : vector<8xf32>
    %140 = vector.multi_reduction <add>, %139, %cst_59 [1] : vector<8x8xf32> to vector<8xf32>
    %141 = vector.shape_cast %140 : vector<8xf32> to vector<8x1xf32>
    %142 = tpu.reciprocal %141 {approx = true} : vector<8x1xf32> -> vector<8x1xf32>
    %143 = vector.broadcast %142 : vector<8x1xf32> to vector<8x8xf32>
    %144 = arith.mulf %139, %143 : vector<8x8xf32>
    %145 = vector.shape_cast %144 : vector<8x8xf32> to vector<8x8x1xf32>
    %146 = vector.broadcast %145 : vector<8x8x1xf32> to vector<8x8x128xf32>
    %147 = arith.mulf %146, %19 : vector<8x8x128xf32>
    %cst_60 = arith.constant dense<0.000000e+00> : vector<8x128xf32>
    %148 = vector.multi_reduction <add>, %147, %cst_60 [1] : vector<8x8x128xf32> to vector<8x128xf32>
    %c0_61 = arith.constant 0 : index
    %c24_62 = arith.constant 24 : index
    %149 = vector.load %arg10[%c0_61, %c24_62] : memref<128x32xf32, #tpu.memory_space<vmem>>, vector<128x8xf32>
    %cst_63 = arith.constant dense<0.000000e+00> : vector<8x8xf32>
    %150 = tpu.matmul %148, %149, %cst_63 {dimension_numbers = #tpu.dot_dimension_numbers<[1], [0], [0], [1], [0, 0, 1, 1], [], []>} : vector<8x128xf32>, vector<128x8xf32>, vector<8x8xf32> -> vector<8x8xf32>
    %151 = arith.addf %121, %150 : vector<8x8xf32>
    %152 = tpu.concatenate %52, %85, %118, %151 in 1 : vector<8x8xf32>, vector<8x8xf32>, vector<8x8xf32>, vector<8x8xf32> -> vector<8x32xf32>
    %c0_64 = arith.constant 0 : index
    %c0_65 = arith.constant 0 : index
    %c0_66 = arith.constant 0 : index
    %153 = vector.load %arg11[%c0_64, %c0_65, %c0_66] : memref<1x8x32xf32, #tpu.memory_space<vmem>>, vector<1x8x32xf32>
    %154 = vector.shape_cast %153 : vector<1x8x32xf32> to vector<8x32xf32>
    %155 = vector.shape_cast %152 : vector<8x32xf32> to vector<1x8x32xf32>
    tpu.vector_store %arg11[%c0_64, %c0_65, %c0_66], %155 {strides = array<i32>} : memref<1x8x32xf32, #tpu.memory_space<vmem>>, vector<1x8x32xf32>,
    return
  }
  func.func @transform_0(%arg0: i32, %arg1: i32) -> (i32, i32, i32) {
    %c0_i32 = arith.constant 0 : i32
    %c0_i32_0 = arith.constant 0 : i32
    return %arg0, %arg1, %c0_i32 : i32, i32, i32
  }
  func.func @transform_1(%arg0: i32, %arg1: i32) -> (i32, i32, i32) {
    %c0_i32 = arith.constant 0 : i32
    %c0_i32_0 = arith.constant 0 : i32
    return %arg0, %arg1, %c0_i32 : i32, i32, i32
  }
  func.func @transform_2(%arg0: i32, %arg1: i32) -> (i32, i32, i32) {
    %c0_i32 = arith.constant 0 : i32
    %c0_i32_0 = arith.constant 0 : i32
    return %arg0, %arg1, %c0_i32 : i32, i32, i32
  }
  func.func @transform_3(%arg0: i32, %arg1: i32) -> (i32, i32, i32) {
    %c0_i32 = arith.constant 0 : i32
    %c0_i32_0 = arith.constant 0 : i32
    return %arg0, %arg1, %c0_i32 : i32, i32, i32
  }
  func.func @transform_4(%arg0: i32, %arg1: i32) -> (i32, i32) {
    %c0_i32 = arith.constant 0 : i32
    %c0_i32_0 = arith.constant 0 : i32
    %c0_i32_1 = arith.constant 0 : i32
    return %c0_i32, %c0_i32_0 : i32, i32
  }
  func.func @transform_5(%arg0: i32, %arg1: i32) -> (i32, i32) {
    %c0_i32 = arith.constant 0 : i32
    %c0_i32_0 = arith.constant 0 : i32
    %c0_i32_1 = arith.constant 0 : i32
    return %c0_i32, %c0_i32_0 : i32, i32
  }
  func.func @transform_6(%arg0: i32, %arg1: i32) -> (i32, i32) {
    %c0_i32 = arith.constant 0 : i32
    %c0_i32_0 = arith.constant 0 : i32
    %c0_i32_1 = arith.constant 0 : i32
    return %c0_i32, %c0_i32_0 : i32, i32
  }
  func.func @transform_7(%arg0: i32, %arg1: i32) -> (i32, i32) {
    %c0_i32 = arith.constant 0 : i32
    %c0_i32_0 = arith.constant 0 : i32
    %c0_i32_1 = arith.constant 0 : i32
    return %c0_i32, %c0_i32_0 : i32, i32
  }
  func.func @transform_8(%arg0: i32, %arg1: i32) -> (i32, i32) {
    %c0_i32 = arith.constant 0 : i32
    %c0_i32_0 = arith.constant 0 : i32
    %c0_i32_1 = arith.constant 0 : i32
    return %c0_i32, %c0_i32_0 : i32, i32
  }
  func.func @transform_9(%arg0: i32, %arg1: i32) -> (i32, i32, i32) {
    %c0_i32 = arith.constant 0 : i32
    %c0_i32_0 = arith.constant 0 : i32
    return %arg0, %arg1, %c0_i32 : i32, i32, i32
  }
}

</mosaic_0001>

<llo_original>
// kernel: tpu_custom_call.1
$region0: #{tpu_custom_call.1}
  #allocation0 [shape = 'u32[]', space=smem, size = 0x4, offset = 0x4, fixed_abs, tag = 'smem constant byte address 0x4 - core index']
  #allocation1 [shape = 'u32[72,128]{1,0:T(1,128)}', space=vmem, size = 0x9000, scoped, tag = 'internal scratch']
  %s0 = inlined_call_operand.vmem [shape: s32[2,8,8], index: 0, kind: input, shape index: {}]
  %s1 = inlined_call_operand.vmem [shape: f32[2,8,32], index: 1, kind: input, shape index: {}]
  %s2 = inlined_call_operand.hbm [shape: f32[2,8,32], index: 2, kind: input, shape index: {}]
  %s3 = inlined_call_operand.hbm [shape: f32[2,8,32], index: 3, kind: input, shape index: {}]
  %s4 = inlined_call_operand.vmem [shape: f32[32,32], index: 4, kind: input, shape index: {}]
  %s5 = inlined_call_operand.vmem [shape: f32[32,32], index: 5, kind: input, shape index: {}]
  %s6 = inlined_call_operand.vmem [shape: f32[32,32], index: 6, kind: input, shape index: {}]
  %s7 = inlined_call_operand.vmem [shape: f32[32,128], index: 7, kind: input, shape index: {}]
  %s8 = inlined_call_operand.vmem [shape: f32[128,32], index: 8, kind: input, shape index: {}]
  %s9 = inlined_call_operand.hbm [shape: f32[2,8,32], index: 9, kind: output, shape index: {}]
  %s10 = sld [smem:[#allocation0]]
  $region77: #{tpu_custom_call.1} parent=0
    _
  %s12 = ssub.s32 1, %s10
  %s13 = scalar_select 0, %s12, %s10
  $region1: #{tpu_custom_call.1} parent=0
    #allocation2 [shape = 'u8[8192]{0}', space=vmem, size = 0x2000, scoped, tag = 'input window, operand 2']
    #allocation3 [shape = 's32[2]{0}', space=sflag, size = 0x8, scoped, tag = 'scoped memory for tpu_custom_call.1']
    #allocation4 [shape = 's32[2]{0}', space=sflag, size = 0x8, scoped, tag = 'scoped memory for tpu_custom_call.1']
    #allocation5 [shape = 'u8[8192]{0}', space=vmem, size = 0x2000, scoped, tag = 'input window, operand 3']
    #allocation6 [shape = 's32[2]{0}', space=sflag, size = 0x8, scoped, tag = 'scoped memory for tpu_custom_call.1']
    #allocation7 [shape = 'u8[8192]{0}', space=vmem, size = 0x2000, scoped, tag = 'output window, operand 0']
    %14 = vsyncpa [#allocation3], 0
    %s15 = scalar_lea.sflag [#allocation3], 1
    %16 = vsyncpa %s15, 0
    %17 = vsyncpa [#allocation6], 0
    %s18 = scalar_lea.sflag [#allocation6], 1
    %19 = vsyncpa %s18, 0
    %20 = vsyncpa [#allocation4], 0
    %s21 = scalar_lea.sflag [#allocation4], 1
    %22 = vsyncpa %s21, 0
    loop: start=0, step=1, limit=4
    $region2: #{tpu_custom_call.1} parent=1 // loop_pre_header
      _
    $region3: #{tpu_custom_call.1} parent=1 // loop_header
      %s24 = sphi 0, %s28
      %p25 = scmp.ge.s32.totalorder %s24, 4
      %s31 = sphi 0, %s43
      %s32 = sphi 0, %s39
      %s33 = sphi 0, %s31
      %s34 = sphi 0, %s32
      %s35 = sphi 0, %s33
      %s36 = sphi 0, %s34
      %s48 = sphi 0, %s50
      %s51 = sphi 0, %s48
      %s52 = sphi 0, %s51
      %s68 = sphi 0, %s52
      %s76 = sphi 0, %s78
      %s79 = sphi 0, %s76
      %s80 = sphi 0, %s79
      %s96 = sphi 0, %s80
      %s104 = sphi 0, %s106
      %s107 = sphi 0, %s104
      %s108 = sphi 0, %s107
      %s124 = sphi 0, %s108
      %s132 = sphi 0, %s134
      %s135 = sphi 0, %s132
      %s136 = sphi 0, %s135
      %s152 = sphi 0, %s136
      %s156 = sphi 0, %s156
      %s158 = sphi 0, %s156
      %s159 = sphi 0, %s158
      %s173 = sphi 0, %s159
      %s177 = sphi 0, %s177
      %s179 = sphi 0, %s177
      %s180 = sphi 0, %s179
      %s194 = sphi 0, %s180
      %s198 = sphi 0, %s198
      %s200 = sphi 0, %s198
      %s201 = sphi 0, %s200
      %s215 = sphi 0, %s201
      %s219 = sphi 0, %s219
      %s221 = sphi 0, %s219
      %s222 = sphi 0, %s221
      %s236 = sphi 0, %s222
      %s240 = sphi 0, %s240
      %s242 = sphi 0, %s240
      %s243 = sphi 0, %s242
      %s257 = sphi 0, %s243
      %s265 = sphi 0, %s267
      %s268 = sphi 0, %s265
      %s269 = sphi 0, %s268
      %s285 = sphi 0, %s269
    $region4: #{tpu_custom_call.1} parent=1 // loop_header_branch
      %27 = sbr.rel (%p25) target = $region8
    $region5: #{tpu_custom_call.1} parent=1 // loop_body
      %s29 = ssub.s32 %s24, 1
      %s30 = ssub.s32 %s24, 2
      %s37 = sadd.s32 1, %s32
      %p38 = scmp.ge.s32.totalorder %s37, 1
      %s39 = scalar_select %p38, 0, %s37
      %s40 = sadd.s32 1, %s31
      %s41 = scalar_select %p38, %s40, %s31
      %p42 = scmp.ge.s32.totalorder %s41, 2
      %s43 = scalar_select %p42, 0, %s41
      %s44 = ssub.s32 %s31, %s43
      %s45 = ssub.s32 %s32, %s39
      %s46 = sor.u32 %s44, %s45
      %p47 = scmp.eq.s32.totalorder %s46, 0
      %s49 = sadd.s32 %s48, 1
      %s50 = scalar_select %p47, %s48, %s49
      %p53 = pneg %p47
      %p54 = scmp.eq.s32.totalorder %s24, 1
      %p55 = por %p53, %p54
      %p56 = scmp.ne.s32.totalorder %s48, %s51
      %p57 = scmp.eq.s32.totalorder %s24, 0
      %p58 = por %p56, %p57
      %p59 = scmp.ne.s32.totalorder %s48, %s51
      %p60 = scmp.eq.s32.totalorder %s29, 1
      %p61 = por %p59, %p60
      %p62 = scmp.ne.s32.totalorder %s51, %s52
      %p63 = scmp.eq.s32.totalorder %s29, 0
      %p64 = por %p62, %p63
      %p65 = scmp.ne.s32.totalorder %s51, %s52
      %p66 = scmp.eq.s32.totalorder %s30, 1
      %p67 = por %p65, %p66
      %p69 = scmp.ne.s32.totalorder %s52, %s68
      %p70 = scmp.eq.s32.totalorder %s30, 0
      %p71 = por %p69, %p70
      %s72 = ssub.s32 %s31, %s43
      %s73 = ssub.s32 %s32, %s39
      %s74 = sor.u32 %s72, %s73
      %p75 = scmp.eq.s32.totalorder %s74, 0
      %s77 = sadd.s32 %s76, 1
      %s78 = scalar_select %p75, %s76, %s77
      %p81 = pneg %p75
      %p82 = scmp.eq.s32.totalorder %s24, 1
      %p83 = por %p81, %p82
      %p84 = scmp.ne.s32.totalorder %s76, %s79
      %p85 = scmp.eq.s32.totalorder %s24, 0
      %p86 = por %p84, %p85
      %p87 = scmp.ne.s32.totalorder %s76, %s79
      %p88 = scmp.eq.s32.totalorder %s29, 1
      %p89 = por %p87, %p88
      %p90 = scmp.ne.s32.totalorder %s79, %s80
      %p91 = scmp.eq.s32.totalorder %s29, 0
      %p92 = por %p90, %p91
      %p93 = scmp.ne.s32.totalorder %s79, %s80
      %p94 = scmp.eq.s32.totalorder %s30, 1
      %p95 = por %p93, %p94
      %p97 = scmp.ne.s32.totalorder %s80, %s96
      %p98 = scmp.eq.s32.totalorder %s30, 0
      %p99 = por %p97, %p98
      %s100 = ssub.s32 %s31, %s43
      %s101 = ssub.s32 %s32, %s39
      %s102 = sor.u32 %s100, %s101
      %p103 = scmp.eq.s32.totalorder %s102, 0
      %s105 = sadd.s32 %s104, 1
      %s106 = scalar_select %p103, %s104, %s105
      %p109 = pneg %p103
      %p110 = scmp.eq.s32.totalorder %s24, 1
      %p111 = por %p109, %p110
      %p112 = scmp.ne.s32.totalorder %s104, %s107
      %p113 = scmp.eq.s32.totalorder %s24, 0
      %p114 = por %p112, %p113
      %p115 = scmp.ne.s32.totalorder %s104, %s107
      %p116 = scmp.eq.s32.totalorder %s29, 1
      %p117 = por %p115, %p116
      %p118 = scmp.ne.s32.totalorder %s107, %s108
      %p119 = scmp.eq.s32.totalorder %s29, 0
      %p120 = por %p118, %p119
      %p121 = scmp.ne.s32.totalorder %s107, %s108
      %p122 = scmp.eq.s32.totalorder %s30, 1
      %p123 = por %p121, %p122
      %p125 = scmp.ne.s32.totalorder %s108, %s124
      %p126 = scmp.eq.s32.totalorder %s30, 0
      %p127 = por %p125, %p126
      %s128 = ssub.s32 %s31, %s43
      %s129 = ssub.s32 %s32, %s39
      %s130 = sor.u32 %s128, %s129
      %p131 = scmp.eq.s32.totalorder %s130, 0
      %s133 = sadd.s32 %s132, 1
      %s134 = scalar_select %p131, %s132, %s133
      %p137 = pneg %p131
      %p138 = scmp.eq.s32.totalorder %s24, 1
      %p139 = por %p137, %p138
      %p140 = scmp.ne.s32.totalorder %s132, %s135
      %p141 = scmp.eq.s32.totalorder %s24, 0
      %p142 = por %p140, %p141
      %p143 = scmp.ne.s32.totalorder %s132, %s135
      %p144 = scmp.eq.s32.totalorder %s29, 1
      %p145 = por %p143, %p144
      %p146 = scmp.ne.s32.totalorder %s135, %s136
      %p147 = scmp.eq.s32.totalorder %s29, 0
      %p148 = por %p146, %p147
      %p149 = scmp.ne.s32.totalorder %s135, %s136
      %p150 = scmp.eq.s32.totalorder %s30, 1
      %p151 = por %p149, %p150
      %p153 = scmp.ne.s32.totalorder %s136, %s152
      %p154 = scmp.eq.s32.totalorder %s30, 0
      %p155 = por %p153, %p154
      %s157 = sadd.s32 %s156, 1
      %p160 = scmp.eq.s32.totalorder %s24, 1
      %p161 = scmp.ne.s32.totalorder %s156, %s158
      %p162 = scmp.eq.s32.totalorder %s24, 0
      %p163 = por %p161, %p162
      %p164 = scmp.ne.s32.totalorder %s156, %s158
      %p165 = scmp.eq.s32.totalorder %s29, 1
      %p166 = por %p164, %p165
      %p167 = scmp.ne.s32.totalorder %s158, %s159
      %p168 = scmp.eq.s32.totalorder %s29, 0
      %p169 = por %p167, %p168
      %p170 = scmp.ne.s32.totalorder %s158, %s159
      %p171 = scmp.eq.s32.totalorder %s30, 1
      %p172 = por %p170, %p171
      %p174 = scmp.ne.s32.totalorder %s159, %s173
      %p175 = scmp.eq.s32.totalorder %s30, 0
      %p176 = por %p174, %p175
      %s178 = sadd.s32 %s177, 1
      %p181 = scmp.eq.s32.totalorder %s24, 1
      %p182 = scmp.ne.s32.totalorder %s177, %s179
      %p183 = scmp.eq.s32.totalorder %s24, 0
      %p184 = por %p182, %p183
      %p185 = scmp.ne.s32.totalorder %s177, %s179
      %p186 = scmp.eq.s32.totalorder %s29, 1
      %p187 = por %p185, %p186
      %p188 = scmp.ne.s32.totalorder %s179, %s180
      %p189 = scmp.eq.s32.totalorder %s29, 0
      %p190 = por %p188, %p189
      %p191 = scmp.ne.s32.totalorder %s179, %s180
      %p192 = scmp.eq.s32.totalorder %s30, 1
      %p193 = por %p191, %p192
      %p195 = scmp.ne.s32.totalorder %s180, %s194
      %p196 = scmp.eq.s32.totalorder %s30, 0
      %p197 = por %p195, %p196
      %s199 = sadd.s32 %s198, 1
      %p202 = scmp.eq.s32.totalorder %s24, 1
      %p203 = scmp.ne.s32.totalorder %s198, %s200
      %p204 = scmp.eq.s32.totalorder %s24, 0
      %p205 = por %p203, %p204
      %p206 = scmp.ne.s32.totalorder %s198, %s200
      %p207 = scmp.eq.s32.totalorder %s29, 1
      %p208 = por %p206, %p207
      %p209 = scmp.ne.s32.totalorder %s200, %s201
      %p210 = scmp.eq.s32.totalorder %s29, 0
      %p211 = por %p209, %p210
      %p212 = scmp.ne.s32.totalorder %s200, %s201
      %p213 = scmp.eq.s32.totalorder %s30, 1
      %p214 = por %p212, %p213
      %p216 = scmp.ne.s32.totalorder %s201, %s215
      %p217 = scmp.eq.s32.totalorder %s30, 0
      %p218 = por %p216, %p217
      %s220 = sadd.s32 %s219, 1
      %p223 = scmp.eq.s32.totalorder %s24, 1
      %p224 = scmp.ne.s32.totalorder %s219, %s221
      %p225 = scmp.eq.s32.totalorder %s24, 0
      %p226 = por %p224, %p225
      %p227 = scmp.ne.s32.totalorder %s219, %s221
      %p228 = scmp.eq.s32.totalorder %s29, 1
      %p229 = por %p227, %p228
      %p230 = scmp.ne.s32.totalorder %s221, %s222
      %p231 = scmp.eq.s32.totalorder %s29, 0
      %p232 = por %p230, %p231
      %p233 = scmp.ne.s32.totalorder %s221, %s222
      %p234 = scmp.eq.s32.totalorder %s30, 1
      %p235 = por %p233, %p234
      %p237 = scmp.ne.s32.totalorder %s222, %s236
      %p238 = scmp.eq.s32.totalorder %s30, 0
      %p239 = por %p237, %p238
      %s241 = sadd.s32 %s240, 1
      %p244 = scmp.eq.s32.totalorder %s24, 1
      %p245 = scmp.ne.s32.totalorder %s240, %s242
      %p246 = scmp.eq.s32.totalorder %s24, 0
      %p247 = por %p245, %p246
      %p248 = scmp.ne.s32.totalorder %s240, %s242
      %p249 = scmp.eq.s32.totalorder %s29, 1
      %p250 = por %p248, %p249
      %p251 = scmp.ne.s32.totalorder %s242, %s243
      %p252 = scmp.eq.s32.totalorder %s29, 0
      %p253 = por %p251, %p252
      %p254 = scmp.ne.s32.totalorder %s242, %s243
      %p255 = scmp.eq.s32.totalorder %s30, 1
      %p256 = por %p254, %p255
      %p258 = scmp.ne.s32.totalorder %s243, %s257
      %p259 = scmp.eq.s32.totalorder %s30, 0
      %p260 = por %p258, %p259
      %s261 = ssub.s32 %s31, %s43
      %s262 = ssub.s32 %s32, %s39
      %s263 = sor.u32 %s261, %s262
      %p264 = scmp.eq.s32.totalorder %s263, 0
      %s266 = sadd.s32 %s265, 1
      %s267 = scalar_select %p264, %s265, %s266
      %p270 = pneg %p264
      %p271 = scmp.eq.s32.totalorder %s24, 1
      %p272 = por %p270, %p271
      %p273 = scmp.ne.s32.totalorder %s265, %s268
      %p274 = scmp.eq.s32.totalorder %s24, 0
      %p275 = por %p273, %p274
      %p276 = scmp.ne.s32.totalorder %s265, %s268
      %p277 = scmp.eq.s32.totalorder %s29, 1
      %p278 = por %p276, %p277
      %p279 = scmp.ne.s32.totalorder %s268, %s269
      %p280 = scmp.eq.s32.totalorder %s29, 0
      %p281 = por %p279, %p280
      %p282 = scmp.ne.s32.totalorder %s268, %s269
      %p283 = scmp.eq.s32.totalorder %s30, 1
      %p284 = por %p282, %p283
      %p286 = scmp.ne.s32.totalorder %s269, %s285
      %p287 = scmp.eq.s32.totalorder %s30, 0
      %p288 = por %p286, %p287
      %p289 = scmp.le.s32.totalorder 1, %s24
      %p290 = scmp.lt.s32.totalorder %s24, 3
      %p291 = pnand %p289, %p290
      %p292 = pneg %p291
      // Predicated region
      $region9: #{tpu_custom_call.1} parent=5 // pred_check
        _
      $region10: #{tpu_custom_call.1} parent=5 // pred_check_branch
        %294 = sbr.rel (%p291) target = $region12
      $region11: #{tpu_custom_call.1} parent=5 // pred_region
        %s295 = ssub.s32 %s24, 1
        // Predicated region
        $region13: #{tpu_custom_call.1} parent=11 // pred_check
          %p296 = pneg %p169
        $region14: #{tpu_custom_call.1} parent=11 // pred_check_branch
          %298 = sbr.rel (%p296) target = $region16
        $region15: #{tpu_custom_call.1} parent=11 // pred_region
          _
        $region16: #{tpu_custom_call.1} parent=11 // pred_fallthru
          _
        // Predicated region
        $region17: #{tpu_custom_call.1} parent=11 // pred_check
          %p299 = pneg %p190
        $region18: #{tpu_custom_call.1} parent=11 // pred_check_branch
          %301 = sbr.rel (%p299) target = $region20
        $region19: #{tpu_custom_call.1} parent=11 // pred_region
          _
        $region20: #{tpu_custom_call.1} parent=11 // pred_fallthru
          _
        // Predicated region
        $region21: #{tpu_custom_call.1} parent=11 // pred_check
          %p302 = pneg %p211
        $region22: #{tpu_custom_call.1} parent=11 // pred_check_branch
          %304 = sbr.rel (%p302) target = $region24
        $region23: #{tpu_custom_call.1} parent=11 // pred_region
          _
        $region24: #{tpu_custom_call.1} parent=11 // pred_fallthru
          _
        // Predicated region
        $region25: #{tpu_custom_call.1} parent=11 // pred_check
          %p305 = pneg %p232
        $region26: #{tpu_custom_call.1} parent=11 // pred_check_branch
          %307 = sbr.rel (%p305) target = $region28
        $region27: #{tpu_custom_call.1} parent=11 // pred_region
          _
        $region28: #{tpu_custom_call.1} parent=11 // pred_fallthru
          _
        // Predicated region
        $region29: #{tpu_custom_call.1} parent=11 // pred_check
          %p308 = pneg %p253
        $region30: #{tpu_custom_call.1} parent=11 // pred_check_branch
          %310 = sbr.rel (%p308) target = $region32
        $region31: #{tpu_custom_call.1} parent=11 // pred_region
          _
        $region32: #{tpu_custom_call.1} parent=11 // pred_fallthru
          _
      $region12: #{tpu_custom_call.1} parent=5 // pred_fallthru
        _
      %p311 = scmp.lt.s32.totalorder %s24, 2
      // Predicated region
      $region33: #{tpu_custom_call.1} parent=5 // pred_check
        %p312 = pneg %p311
      $region34: #{tpu_custom_call.1} parent=5 // pred_check_branch
        %314 = sbr.rel (%p312) target = $region36
      $region35: #{tpu_custom_call.1} parent=5 // pred_region
        // Predicated region
        $region37: #{tpu_custom_call.1} parent=35 // pred_check
          %p315 = pneg %p58
        $region38: #{tpu_custom_call.1} parent=35 // pred_check_branch
          %317 = sbr.rel (%p315) target = $region40
        $region39: #{tpu_custom_call.1} parent=35 // pred_region
          %p318 = scmp.lt.s32.totalorder %s31, 1
          %s319 = scalar_select %p318, %s31, 1
          %p320 = scmp.lt.s32.totalorder %s32, 0
          %s321 = scalar_select %p320, %s32, 0
          %s322 = sadd.s32 %s321, %s319
          %s323 = smul.addr %s322, 8
          %s324 = scalar_lea.vmem %s0, %s323
        $region40: #{tpu_custom_call.1} parent=35 // pred_fallthru
          _
        // Predicated region
        $region41: #{tpu_custom_call.1} parent=35 // pred_check
          %p325 = pneg %p86
        $region42: #{tpu_custom_call.1} parent=35 // pred_check_branch
          %327 = sbr.rel (%p325) target = $region44
        $region43: #{tpu_custom_call.1} parent=35 // pred_region
          %p328 = scmp.lt.s32.totalorder %s31, 1
          %s329 = scalar_select %p328, %s31, 1
          %p330 = scmp.lt.s32.totalorder %s32, 0
          %s331 = scalar_select %p330, %s32, 0
          %s332 = sadd.s32 %s331, %s329
          %s333 = smul.addr %s332, 8
          %s334 = scalar_lea.vmem %s1, %s333
        $region44: #{tpu_custom_call.1} parent=35 // pred_fallthru
          _
        // Predicated region
        $region45: #{tpu_custom_call.1} parent=35 // pred_check
          %p335 = pneg %p114
        $region46: #{tpu_custom_call.1} parent=35 // pred_check_branch
          %337 = sbr.rel (%p335) target = $region48
        $region47: #{tpu_custom_call.1} parent=35 // pred_region
          %s338 = sand.u32 %s104, 1
          %s339 = scalar_lea.sflag [#allocation3], %s338
          %s340 = sand.u32 %s104, 1
          %s341 = smul.addr %s340, 8
          %s342 = scalar_lea.vmem [#allocation2], %s341
          %344 = vsyncadd %s339, 0
          %s345 = sadd.s32 %s32, %s31
          %s346 = smul.addr %s345, 8
          %s347 = scalar_lea.hbm %s2, %s346
          %s349 = sshll.u32 %s347, 4
          %s350 = int_to_ptr.hbm [resolvable:$true] %s349
          %s351 = sshll.u32 %s342, 4
          %s352 = int_to_ptr.vmem [resolvable:$true] %s351
          %354 = dma.hbm_to_vmem [thread:$0]  %s350, 128, %s352, %s339
        $region48: #{tpu_custom_call.1} parent=35 // pred_fallthru
          _
        // Predicated region
        $region49: #{tpu_custom_call.1} parent=35 // pred_check
          %p355 = pneg %p142
        $region50: #{tpu_custom_call.1} parent=35 // pred_check_branch
          %357 = sbr.rel (%p355) target = $region52
        $region51: #{tpu_custom_call.1} parent=35 // pred_region
          %s358 = sand.u32 %s132, 1
          %s359 = scalar_lea.sflag [#allocation6], %s358
          %s360 = sand.u32 %s132, 1
          %s361 = smul.addr %s360, 8
          %s362 = scalar_lea.vmem [#allocation5], %s361
          %364 = vsyncadd %s359, 0
          %s365 = sadd.s32 %s32, %s31
          %s366 = smul.addr %s365, 8
          %s367 = scalar_lea.hbm %s3, %s366
          %s369 = sshll.u32 %s367, 4
          %s370 = int_to_ptr.hbm [resolvable:$true] %s369
          %s371 = sshll.u32 %s362, 4
          %s372 = int_to_ptr.vmem [resolvable:$true] %s371
          %374 = dma.hbm_to_vmem [thread:$0]  %s370, 128, %s372, %s359
        $region52: #{tpu_custom_call.1} parent=35 // pred_fallthru
          _
      $region36: #{tpu_custom_call.1} parent=5 // pred_fallthru
        _
      %p375 = scmp.le.s32.totalorder 1, %s24
      %p376 = scmp.lt.s32.totalorder %s24, 3
      %p377 = pnand %p375, %p376
      %p378 = pneg %p377
      // Predicated region
      $region53: #{tpu_custom_call.1} parent=5 // pred_check
        _
      $region54: #{tpu_custom_call.1} parent=5 // pred_check_branch
        %380 = sbr.rel (%p377) target = $region56
      $region55: #{tpu_custom_call.1} parent=5 // pred_region
        %s381 = ssub.s32 %s24, 1
        %s382 = sand.u32 %s107, 1
        %s383 = scalar_lea.sflag [#allocation3], %s382
        %s384 = sand.u32 %s107, 1
        %s385 = smul.addr %s384, 8
        %s386 = scalar_lea.vmem [#allocation2], %s385
        // Predicated region
        $region57: #{tpu_custom_call.1} parent=55 // pred_check
          %p387 = pneg %p120
        $region58: #{tpu_custom_call.1} parent=55 // pred_check_branch
          %389 = sbr.rel (%p387) target = $region60
        $region59: #{tpu_custom_call.1} parent=55 // pred_region
          %391 = dma.done %s383, 128
        $region60: #{tpu_custom_call.1} parent=55 // pred_fallthru
          _
        %s392 = sand.u32 %s135, 1
        %s393 = scalar_lea.sflag [#allocation6], %s392
        %s394 = sand.u32 %s135, 1
        %s395 = smul.addr %s394, 8
        %s396 = scalar_lea.vmem [#allocation5], %s395
        // Predicated region
        $region61: #{tpu_custom_call.1} parent=55 // pred_check
          %p397 = pneg %p148
        $region62: #{tpu_custom_call.1} parent=55 // pred_check_branch
          %399 = sbr.rel (%p397) target = $region64
        $region63: #{tpu_custom_call.1} parent=55 // pred_region
          %401 = dma.done %s393, 128
        $region64: #{tpu_custom_call.1} parent=55 // pred_fallthru
          _
        %p402 = scmp.lt.s32.totalorder %s33, 1
        %s403 = scalar_select %p402, %s33, 1
        %p404 = scmp.lt.s32.totalorder %s34, 0
        %s405 = scalar_select %p404, %s34, 0
        %s406 = sadd.s32 %s405, %s403
        %s407 = smul.addr %s406, 8
        %s408 = scalar_lea.vmem %s0, %s407
        %p409 = pneg %p64
        %p410 = pneg %p61
        %p411 = scmp.lt.s32.totalorder %s33, 1
        %s412 = scalar_select %p411, %s33, 1
        %p413 = scmp.lt.s32.totalorder %s34, 0
        %s414 = scalar_select %p413, %s34, 0
        %s415 = sadd.s32 %s414, %s412
        %s416 = smul.addr %s415, 8
        %s417 = scalar_lea.vmem %s1, %s416
        %p418 = pneg %p92
        %p419 = pneg %p89
        %s420 = sand.u32 %s107, 1
        %s421 = scalar_lea.sflag [#allocation3], %s420
        %s422 = sand.u32 %s107, 1
        %s423 = smul.addr %s422, 8
        %s424 = scalar_lea.vmem [#allocation2], %s423
        %p425 = pneg %p120
        %p426 = pneg %p117
        %s427 = sand.u32 %s135, 1
        %s428 = scalar_lea.sflag [#allocation6], %s427
        %s429 = sand.u32 %s135, 1
        %s430 = smul.addr %s429, 8
        %s431 = scalar_lea.vmem [#allocation5], %s430
        %p432 = pneg %p148
        %p433 = pneg %p145
        %p434 = pneg %p169
        %p435 = pneg %p166
        %p436 = pneg %p190
        %p437 = pneg %p187
        %p438 = pneg %p211
        %p439 = pneg %p208
        %p440 = pneg %p232
        %p441 = pneg %p229
        %p442 = pneg %p253
        %p443 = pneg %p250
        %p444 = pneg %p281
        %p445 = pneg %p278
        %s446 = sand.u32 %s268, 1
        %s447 = scalar_lea.sflag [#allocation4], %s446
        %s448 = sand.u32 %s268, 1
        %s449 = smul.addr %s448, 8
        %s450 = scalar_lea.vmem [#allocation7], %s449
        %p451 = scmp.lt.s32.totalorder %s33, 1
        %s452 = scalar_select %p451, %s33, 1
        %p453 = scmp.lt.s32.totalorder %s34, 0
        %s454 = scalar_select %p453, %s34, 0
        %s455 = sadd.s32 %s454, %s452
        %s456 = smul.addr %s455, 8
        %s457 = scalar_lea.vmem %s0, %s456
        %p458 = scmp.lt.s32.totalorder %s33, 1
        %s459 = scalar_select %p458, %s33, 1
        %p460 = scmp.lt.s32.totalorder %s34, 0
        %s461 = scalar_select %p460, %s34, 0
        %s462 = sadd.s32 %s461, %s459
        %s463 = smul.addr %s462, 8
        %s464 = scalar_lea.vmem %s1, %s463
        %v465 = vld [vmem:[%s464] sm:$0xff]
        %v466 = vld [vmem:[%s4] sm:$0xff]
        %v467 = vld [vmem:[%s4 + $0x8] sm:$0xff]
        %v468 = vld [vmem:[%s4 + $0x10] sm:$0xff]
        %v469 = vld [vmem:[%s4 + $0x18] sm:$0xff]
        %vm470 = vcmask 261120
        %v472 = vsel %vm470, %v465, 0
        %474 = vmatpush.msra.mxu0 0.0
        %475 = vmatpush.msra.mxu0 0.0
        %476 = vmatpush.msra.mxu0 0.0
        %477 = vmatpush.msra.mxu0 0.0
        %478 = vmatpush.msra.mxu0 0.0
        %479 = vmatpush.msra.mxu0 0.0
        %480 = vmatpush.msra.mxu0 0.0
        %481 = vmatpush.msra.mxu0 0.0
        %482 = vmatpush.msra.mxu0 0.0
        %483 = vmatpush.msra.mxu0 0.0
        %484 = vmatpush.msra.mxu0 0.0
        %485 = vmatpush.msra.mxu0 0.0
        %486 = vmatpush.msra.mxu0 %v469
        %487 = vmatpush.msra.mxu0 %v468
        %488 = vmatpush.msra.mxu0 %v467
        %489 = vmatpush.msra.mxu0 %v466
        %490 = vmatmul.f32.gmra.mxu0 %v472
        %v491 = vpop.f32.mrf.mxu0
        %v492 = vadd.f32 0.0, %v491
        %493 = vdwg.mxu0
        %v494 = vld [vmem:[%s386] sm:$0xff]
        %v495 = vld [vmem:[%s5] sm:$0xff]
        %v496 = vld [vmem:[%s5 + $0x8] sm:$0xff]
        %v497 = vld [vmem:[%s5 + $0x10] sm:$0xff]
        %v498 = vld [vmem:[%s5 + $0x18] sm:$0xff]
        %v500 = vsel %vm470, %v494, 0
        %502 = vmatpush.msra.mxu0 0.0
        %503 = vmatpush.msra.mxu0 0.0
        %504 = vmatpush.msra.mxu0 0.0
        %505 = vmatpush.msra.mxu0 0.0
        %506 = vmatpush.msra.mxu0 0.0
        %507 = vmatpush.msra.mxu0 0.0
        %508 = vmatpush.msra.mxu0 0.0
        %509 = vmatpush.msra.mxu0 0.0
        %510 = vmatpush.msra.mxu0 0.0
        %511 = vmatpush.msra.mxu0 0.0
        %512 = vmatpush.msra.mxu0 0.0
        %513 = vmatpush.msra.mxu0 0.0
        %514 = vmatpush.msra.mxu0 %v498
        %515 = vmatpush.msra.mxu0 %v497
        %516 = vmatpush.msra.mxu0 %v496
        %517 = vmatpush.msra.mxu0 %v495
        %518 = vmatmul.f32.gmra.mxu0 %v500
        %v519 = vpop.f32.mrf.mxu0
        %v520 = vadd.f32 0.0, %v519
        %521 = vdwg.mxu0
        %v522 = vld [vmem:[%s396] sm:$0xff]
        %v523 = vld [vmem:[%s6] sm:$0xff]
        %v524 = vld [vmem:[%s6 + $0x8] sm:$0xff]
        %v525 = vld [vmem:[%s6 + $0x10] sm:$0xff]
        %v526 = vld [vmem:[%s6 + $0x18] sm:$0xff]
        %v528 = vsel %vm470, %v522, 0
        %530 = vmatpush.msra.mxu0 0.0
        %531 = vmatpush.msra.mxu0 0.0
        %532 = vmatpush.msra.mxu0 0.0
        %533 = vmatpush.msra.mxu0 0.0
        %534 = vmatpush.msra.mxu0 0.0
        %535 = vmatpush.msra.mxu0 0.0
        %536 = vmatpush.msra.mxu0 0.0
        %537 = vmatpush.msra.mxu0 0.0
        %538 = vmatpush.msra.mxu0 0.0
        %539 = vmatpush.msra.mxu0 0.0
        %540 = vmatpush.msra.mxu0 0.0
        %541 = vmatpush.msra.mxu0 0.0
        %542 = vmatpush.msra.mxu0 %v526
        %543 = vmatpush.msra.mxu0 %v525
        %544 = vmatpush.msra.mxu0 %v524
        %545 = vmatpush.msra.mxu0 %v523
        %546 = vmatmul.f32.gmra.mxu0 %v528
        %v547 = vpop.f32.mrf.mxu0
        %v548 = vadd.f32 0.0, %v547
        %549 = vdwg.mxu0
        %v550 = vld [vmem:[%s457] sm:$0xff]
        %v551 = vlaneseq
        %v552 = vand.u32 %v551, 127
        %v553 = vperm.slane %v550, 0
        %v554 = vlaneseq
        %v555 = vshrl.u32 %v554, 7
        %557 = vset.pattern.permute.xlu0 %v555
        %558 = vperm.xlu0 %557, %v553
        %v559 = vpop.permute.xlu0 %558
        %v560 = vperm.slane %v550, 1
        %v561 = vlaneseq
        %v562 = vshrl.u32 %v561, 7
        %564 = vset.pattern.permute.xlu0 %v562
        %565 = vperm.xlu0 %564, %v560
        %v566 = vpop.permute.xlu0 %565
        %v567 = vperm.slane %v550, 2
        %v568 = vlaneseq
        %v569 = vshrl.u32 %v568, 7
        %571 = vset.pattern.permute.xlu0 %v569
        %572 = vperm.xlu0 %571, %v567
        %v573 = vpop.permute.xlu0 %572
        %v574 = vperm.slane %v550, 3
        %v575 = vlaneseq
        %v576 = vshrl.u32 %v575, 7
        %578 = vset.pattern.permute.xlu0 %v576
        %579 = vperm.xlu0 %578, %v574
        %v580 = vpop.permute.xlu0 %579
        %v581 = vperm.slane %v550, 4
        %v582 = vlaneseq
        %v583 = vshrl.u32 %v582, 7
        %585 = vset.pattern.permute.xlu0 %v583
        %586 = vperm.xlu0 %585, %v581
        %v587 = vpop.permute.xlu0 %586
        %v588 = vperm.slane %v550, 5
        %v589 = vlaneseq
        %v590 = vshrl.u32 %v589, 7
        %592 = vset.pattern.permute.xlu0 %v590
        %593 = vperm.xlu0 %592, %v588
        %v594 = vpop.permute.xlu0 %593
        %v595 = vperm.slane %v550, 6
        %v596 = vlaneseq
        %v597 = vshrl.u32 %v596, 7
        %599 = vset.pattern.permute.xlu0 %v597
        %600 = vperm.xlu0 %599, %v595
        %v601 = vpop.permute.xlu0 %600
        %v602 = vperm.slane %v550, 7
        %v603 = vlaneseq
        %v604 = vshrl.u32 %v603, 7
        %606 = vset.pattern.permute.xlu0 %v604
        %607 = vperm.xlu0 %606, %v602
        %v608 = vpop.permute.xlu0 %607
        %vm609 = vcmp.eq.s32.totalorder %v559, %v552
        %vm610 = vcmp.eq.s32.totalorder %v566, %v552
        %vm611 = vcmp.eq.s32.totalorder %v573, %v552
        %vm612 = vcmp.eq.s32.totalorder %v580, %v552
        %vm613 = vcmp.eq.s32.totalorder %v587, %v552
        %vm614 = vcmp.eq.s32.totalorder %v594, %v552
        %vm615 = vcmp.eq.s32.totalorder %v601, %v552
        %vm616 = vcmp.eq.s32.totalorder %v608, %v552
        %v617 = vsel %vm609, 1, 0
        %v618 = vsel %vm610, 1, 0
        %v619 = vsel %vm611, 1, 0
        %v620 = vsel %vm612, 1, 0
        %v621 = vsel %vm613, 1, 0
        %v622 = vsel %vm614, 1, 0
        %v623 = vsel %vm615, 1, 0
        %v624 = vsel %vm616, 1, 0
        %v625 = vcvt.s32.f32 %v617
        %v626 = vcvt.s32.f32 %v618
        %v627 = vcvt.s32.f32 %v619
        %v628 = vcvt.s32.f32 %v620
        %v629 = vcvt.s32.f32 %v621
        %v630 = vcvt.s32.f32 %v622
        %v631 = vcvt.s32.f32 %v623
        %v632 = vcvt.s32.f32 %v624
        %v633 = vld [vmem:[%s7] sm:$0xff]
        %vm634 = vcmask 64512
        %v636 = vsel %vm634, %v492, 0
        %638 = vmatpush.msra.mxu0 0.0
        %639 = vmatpush.msra.mxu0 0.0
        %640 = vmatpush.msra.mxu0 0.0
        %641 = vmatpush.msra.mxu0 0.0
        %642 = vmatpush.msra.mxu0 0.0
        %643 = vmatpush.msra.mxu0 0.0
        %644 = vmatpush.msra.mxu0 0.0
        %645 = vmatpush.msra.mxu0 0.0
        %646 = vmatpush.msra.mxu0 0.0
        %647 = vmatpush.msra.mxu0 0.0
        %648 = vmatpush.msra.mxu0 0.0
        %649 = vmatpush.msra.mxu0 0.0
        %650 = vmatpush.msra.mxu0 0.0
        %651 = vmatpush.msra.mxu0 0.0
        %652 = vmatpush.msra.mxu0 0.0
        %653 = vmatpush.msra.mxu0 %v633
        %654 = vmatmul.f32.gmra.mxu0 %v636
        %v655 = vpop.f32.mrf.mxu0
        %v656 = vadd.f32 0.0, %v655
        %657 = vdwg.mxu0
        %v658 = vmul.f32 %v492, %v520
        %v659 = vsel %vm634, %v658, 0.0
        %660 = vadd.xlane.f32.xlu0 %v659
        %v661 = vpop.xlane.xlu0 %660
        %v663 = vrot.slane %v656, 1
        %v664 = vrot.slane %v656, 2
        %v665 = vrot.slane %v656, 3
        %v666 = vrot.slane %v656, 4
        %v667 = vrot.slane %v656, 5
        %v668 = vrot.slane %v656, 6
        %v669 = vrot.slane %v656, 7
        %v670 = vperm.slane %v656, 0
        %v671 = vperm.slane %v663, 0
        %v672 = vperm.slane %v664, 0
        %v673 = vperm.slane %v665, 0
        %v674 = vperm.slane %v666, 0
        %v675 = vperm.slane %v667, 0
        %v676 = vperm.slane %v668, 0
        %v677 = vperm.slane %v669, 0
        %v686 = vmul.f32 %v670, %v625
        %v687 = vmul.f32 %v671, %v626
        %v688 = vmul.f32 %v672, %v627
        %v689 = vmul.f32 %v673, %v628
        %v690 = vmul.f32 %v674, %v629
        %v691 = vmul.f32 %v675, %v630
        %v692 = vmul.f32 %v676, %v631
        %v693 = vmul.f32 %v677, %v632
        %694 = vadd.xlane.f32.xlu0 %v686
        %v695 = vpop.xlane.xlu0 %694
        %696 = vadd.xlane.f32.xlu0 %v687
        %v697 = vpop.xlane.xlu0 %696
        %698 = vadd.xlane.f32.xlu0 %v688
        %v699 = vpop.xlane.xlu0 %698
        %700 = vadd.xlane.f32.xlu0 %v689
        %v701 = vpop.xlane.xlu0 %700
        %702 = vadd.xlane.f32.xlu0 %v690
        %v703 = vpop.xlane.xlu0 %702
        %704 = vadd.xlane.f32.xlu0 %v691
        %v705 = vpop.xlane.xlu0 %704
        %706 = vadd.xlane.f32.xlu0 %v692
        %v707 = vpop.xlane.xlu0 %706
        %708 = vadd.xlane.f32.xlu0 %v693
        %v709 = vpop.xlane.xlu0 %708
        %v718 = vperm.slane %v695, %v552
        %v719 = vperm.slane %v697, %v552
        %v720 = vperm.slane %v699, %v552
        %v721 = vperm.slane %v701, %v552
        %v722 = vperm.slane %v703, %v552
        %v723 = vperm.slane %v705, %v552
        %v724 = vperm.slane %v707, %v552
        %v725 = vperm.slane %v709, %v552
        %vm726 = vcmask 1041409
        %v727 = vsel %vm726, %v719, %v718
        %vm728 = vcmask 1042434
        %v729 = vsel %vm728, %v720, %v727
        %vm730 = vcmask 1043459
        %v731 = vsel %vm730, %v721, %v729
        %vm732 = vcmask 1044484
        %v733 = vsel %vm732, %v722, %v731
        %vm734 = vcmask 1045509
        %v735 = vsel %vm734, %v723, %v733
        %vm736 = vcmask 1046534
        %v737 = vsel %vm736, %v724, %v735
        %vm738 = vcmask 1047559
        %v739 = vsel %vm738, %v725, %v737
        %v741 = vadd.f32 %v661, %v739
        %v742 = vmul.f32 %v741, 0.35355338
        %v743 = vsel %vm634, %v742, -inf
        %744 = vmax.xlane.f32.xlu0 %v743
        %v745 = vpop.xlane.xlu0 %744
        %v746 = vsub.f32 %v742, %v745
        %v747 = vmul.f32 %v746, 1.442695
        %v748 = vpow.pop %v747
        %v749 = vsel %vm634, %v748, 0.0
        %750 = vadd.xlane.f32.xlu0 %v749
        %v751 = vpop.xlane.xlu0 %750
        %v752 = vrcp.pop %v751
        %v753 = vmul.f32 %v748, %v752
        %v754 = vperm.slane %v753, 0
        %v755 = vlaneseq
        %v756 = vshrl.u32 %v755, 7
        %758 = vset.pattern.permute.xlu0 %v756
        %759 = vperm.xlu0 %758, %v754
        %v760 = vpop.permute.xlu0 %759
        %v761 = vperm.slane %v753, 1
        %v762 = vlaneseq
        %v763 = vshrl.u32 %v762, 7
        %765 = vset.pattern.permute.xlu0 %v763
        %766 = vperm.xlu0 %765, %v761
        %v767 = vpop.permute.xlu0 %766
        %v768 = vperm.slane %v753, 2
        %v769 = vlaneseq
        %v770 = vshrl.u32 %v769, 7
        %772 = vset.pattern.permute.xlu0 %v770
        %773 = vperm.xlu0 %772, %v768
        %v774 = vpop.permute.xlu0 %773
        %v775 = vperm.slane %v753, 3
        %v776 = vlaneseq
        %v777 = vshrl.u32 %v776, 7
        %779 = vset.pattern.permute.xlu0 %v777
        %780 = vperm.xlu0 %779, %v775
        %v781 = vpop.permute.xlu0 %780
        %v782 = vperm.slane %v753, 4
        %v783 = vlaneseq
        %v784 = vshrl.u32 %v783, 7
        %786 = vset.pattern.permute.xlu0 %v784
        %787 = vperm.xlu0 %786, %v782
        %v788 = vpop.permute.xlu0 %787
        %v789 = vperm.slane %v753, 5
        %v790 = vlaneseq
        %v791 = vshrl.u32 %v790, 7
        %793 = vset.pattern.permute.xlu0 %v791
        %794 = vperm.xlu0 %793, %v789
        %v795 = vpop.permute.xlu0 %794
        %v796 = vperm.slane %v753, 6
        %v797 = vlaneseq
        %v798 = vshrl.u32 %v797, 7
        %800 = vset.pattern.permute.xlu0 %v798
        %801 = vperm.xlu0 %800, %v796
        %v802 = vpop.permute.xlu0 %801
        %v803 = vperm.slane %v753, 7
        %v804 = vlaneseq
        %v805 = vshrl.u32 %v804, 7
        %807 = vset.pattern.permute.xlu0 %v805
        %808 = vperm.xlu0 %807, %v803
        %v809 = vpop.permute.xlu0 %808
        %v810 = vmul.f32 %v760, %v625
        %v811 = vmul.f32 %v767, %v626
        %v812 = vmul.f32 %v774, %v627
        %v813 = vmul.f32 %v781, %v628
        %v814 = vmul.f32 %v788, %v629
        %v815 = vmul.f32 %v795, %v630
        %v816 = vmul.f32 %v802, %v631
        %v817 = vmul.f32 %v809, %v632
        %v818 = vrot.slane %v810, 4
        %v819 = vadd.f32 %v810, %v818
        %v820 = vrot.slane %v819, 2
        %v821 = vadd.f32 %v819, %v820
        %v822 = vrot.slane %v821, 1
        %v823 = vadd.f32 %v821, %v822
        %v824 = vrot.slane %v811, 4
        %v825 = vadd.f32 %v811, %v824
        %v826 = vrot.slane %v825, 2
        %v827 = vadd.f32 %v825, %v826
        %v828 = vrot.slane %v827, 1
        %v829 = vadd.f32 %v827, %v828
        %v830 = vrot.slane %v812, 4
        %v831 = vadd.f32 %v812, %v830
        %v832 = vrot.slane %v831, 2
        %v833 = vadd.f32 %v831, %v832
        %v834 = vrot.slane %v833, 1
        %v835 = vadd.f32 %v833, %v834
        %v836 = vrot.slane %v813, 4
        %v837 = vadd.f32 %v813, %v836
        %v838 = vrot.slane %v837, 2
        %v839 = vadd.f32 %v837, %v838
        %v840 = vrot.slane %v839, 1
        %v841 = vadd.f32 %v839, %v840
        %v842 = vrot.slane %v814, 4
        %v843 = vadd.f32 %v814, %v842
        %v844 = vrot.slane %v843, 2
        %v845 = vadd.f32 %v843, %v844
        %v846 = vrot.slane %v845, 1
        %v847 = vadd.f32 %v845, %v846
        %v848 = vrot.slane %v815, 4
        %v849 = vadd.f32 %v815, %v848
        %v850 = vrot.slane %v849, 2
        %v851 = vadd.f32 %v849, %v850
        %v852 = vrot.slane %v851, 1
        %v853 = vadd.f32 %v851, %v852
        %v854 = vrot.slane %v816, 4
        %v855 = vadd.f32 %v816, %v854
        %v856 = vrot.slane %v855, 2
        %v857 = vadd.f32 %v855, %v856
        %v858 = vrot.slane %v857, 1
        %v859 = vadd.f32 %v857, %v858
        %v860 = vrot.slane %v817, 4
        %v861 = vadd.f32 %v817, %v860
        %v862 = vrot.slane %v861, 2
        %v863 = vadd.f32 %v861, %v862
        %v864 = vrot.slane %v863, 1
        %v865 = vadd.f32 %v863, %v864
        %v866 = vld [vmem:[%s8] sm:$0xff]
        %v867 = vld [vmem:[%s8 + $0x8] sm:$0xff]
        %v868 = vld [vmem:[%s8 + $0x10] sm:$0xff]
        %v869 = vld [vmem:[%s8 + $0x18] sm:$0xff]
        %v870 = vld [vmem:[%s8 + $0x20] sm:$0xff]
        %v871 = vld [vmem:[%s8 + $0x28] sm:$0xff]
        %v872 = vld [vmem:[%s8 + $0x30] sm:$0xff]
        %v873 = vld [vmem:[%s8 + $0x38] sm:$0xff]
        %v874 = vld [vmem:[%s8 + $0x40] sm:$0xff]
        %v875 = vld [vmem:[%s8 + $0x48] sm:$0xff]
        %v876 = vld [vmem:[%s8 + $0x50] sm:$0xff]
        %v877 = vld [vmem:[%s8 + $0x58] sm:$0xff]
        %v878 = vld [vmem:[%s8 + $0x60] sm:$0xff]
        %v879 = vld [vmem:[%s8 + $0x68] sm:$0xff]
        %v880 = vld [vmem:[%s8 + $0x70] sm:$0xff]
        %v881 = vld [vmem:[%s8 + $0x78] sm:$0xff]
        %v890 = vsel %vm726, %v829, %v823
        %v891 = vsel %vm728, %v835, %v890
        %v892 = vsel %vm730, %v841, %v891
        %v893 = vsel %vm732, %v847, %v892
        %v894 = vsel %vm734, %v853, %v893
        %v895 = vsel %vm736, %v859, %v894
        %v896 = vsel %vm738, %v865, %v895
        %898 = vmatpush.msra.mxu0 %v881
        %899 = vmatpush.msra.mxu0 %v880
        %900 = vmatpush.msra.mxu0 %v879
        %901 = vmatpush.msra.mxu0 %v878
        %902 = vmatpush.msra.mxu0 %v877
        %903 = vmatpush.msra.mxu0 %v876
        %904 = vmatpush.msra.mxu0 %v875
        %905 = vmatpush.msra.mxu0 %v874
        %906 = vmatpush.msra.mxu0 %v873
        %907 = vmatpush.msra.mxu0 %v872
        %908 = vmatpush.msra.mxu0 %v871
        %909 = vmatpush.msra.mxu0 %v870
        %910 = vmatpush.msra.mxu0 %v869
        %911 = vmatpush.msra.mxu0 %v868
        %912 = vmatpush.msra.mxu0 %v867
        %913 = vmatpush.msra.mxu0 %v866
        %914 = vmatmul.f32.gmra.mxu0 %v896
        %v915 = vpop.f32.mrf.mxu0
        %v916 = vadd.f32 0.0, %v915
        %917 = vdwg.mxu0
        %v918 = vadd.f32 %v548, %v916
        %v919 = vld [vmem:[%s7 + $0x8] sm:$0xff]
        %920 = vrot.lane.b32.xlu0 %v492, 120
        %v921 = vpop.permute.xlu0 %920
        %v922 = vsel %vm634, %v921, 0
        %924 = vmatpush.msra.mxu0 0.0
        %925 = vmatpush.msra.mxu0 0.0
        %926 = vmatpush.msra.mxu0 0.0
        %927 = vmatpush.msra.mxu0 0.0
        %928 = vmatpush.msra.mxu0 0.0
        %929 = vmatpush.msra.mxu0 0.0
        %930 = vmatpush.msra.mxu0 0.0
        %931 = vmatpush.msra.mxu0 0.0
        %932 = vmatpush.msra.mxu0 0.0
        %933 = vmatpush.msra.mxu0 0.0
        %934 = vmatpush.msra.mxu0 0.0
        %935 = vmatpush.msra.mxu0 0.0
        %936 = vmatpush.msra.mxu0 0.0
        %937 = vmatpush.msra.mxu0 0.0
        %938 = vmatpush.msra.mxu0 0.0
        %939 = vmatpush.msra.mxu0 %v919
        %940 = vmatmul.f32.gmra.mxu0 %v922
        %v941 = vpop.f32.mrf.mxu0
        %v942 = vadd.f32 0.0, %v941
        %943 = vdwg.mxu0
        %945 = vrot.lane.b32.xlu0 %v658, 120
        %v946 = vpop.permute.xlu0 %945
        %v948 = vsel %vm634, %v946, 0.0
        %949 = vadd.xlane.f32.xlu0 %v948
        %v950 = vpop.xlane.xlu0 %949
        %v952 = vrot.slane %v942, 1
        %v953 = vrot.slane %v942, 2
        %v954 = vrot.slane %v942, 3
        %v955 = vrot.slane %v942, 4
        %v956 = vrot.slane %v942, 5
        %v957 = vrot.slane %v942, 6
        %v958 = vrot.slane %v942, 7
        %v959 = vperm.slane %v942, 0
        %v960 = vperm.slane %v952, 0
        %v961 = vperm.slane %v953, 0
        %v962 = vperm.slane %v954, 0
        %v963 = vperm.slane %v955, 0
        %v964 = vperm.slane %v956, 0
        %v965 = vperm.slane %v957, 0
        %v966 = vperm.slane %v958, 0
        %v975 = vmul.f32 %v959, %v625
        %v976 = vmul.f32 %v960, %v626
        %v977 = vmul.f32 %v961, %v627
        %v978 = vmul.f32 %v962, %v628
        %v979 = vmul.f32 %v963, %v629
        %v980 = vmul.f32 %v964, %v630
        %v981 = vmul.f32 %v965, %v631
        %v982 = vmul.f32 %v966, %v632
        %983 = vadd.xlane.f32.xlu0 %v975
        %v984 = vpop.xlane.xlu0 %983
        %985 = vadd.xlane.f32.xlu0 %v976
        %v986 = vpop.xlane.xlu0 %985
        %987 = vadd.xlane.f32.xlu0 %v977
        %v988 = vpop.xlane.xlu0 %987
        %989 = vadd.xlane.f32.xlu0 %v978
        %v990 = vpop.xlane.xlu0 %989
        %991 = vadd.xlane.f32.xlu0 %v979
        %v992 = vpop.xlane.xlu0 %991
        %993 = vadd.xlane.f32.xlu0 %v980
        %v994 = vpop.xlane.xlu0 %993
        %995 = vadd.xlane.f32.xlu0 %v981
        %v996 = vpop.xlane.xlu0 %995
        %997 = vadd.xlane.f32.xlu0 %v982
        %v998 = vpop.xlane.xlu0 %997
        %v1007 = vperm.slane %v984, %v552
        %v1008 = vperm.slane %v986, %v552
        %v1009 = vperm.slane %v988, %v552
        %v1010 = vperm.slane %v990, %v552
        %v1011 = vperm.slane %v992, %v552
        %v1012 = vperm.slane %v994, %v552
        %v1013 = vperm.slane %v996, %v552
        %v1014 = vperm.slane %v998, %v552
        %v1015 = vsel %vm726, %v1008, %v1007
        %v1016 = vsel %vm728, %v1009, %v1015
        %v1017 = vsel %vm730, %v1010, %v1016
        %v1018 = vsel %vm732, %v1011, %v1017
        %v1019 = vsel %vm734, %v1012, %v1018
        %v1020 = vsel %vm736, %v1013, %v1019
        %v1021 = vsel %vm738, %v1014, %v1020
        %v1023 = vadd.f32 %v950, %v1021
        %v1024 = vmul.f32 %v1023, 0.35355338
        %v1025 = vsel %vm634, %v1024, -inf
        %1026 = vmax.xlane.f32.xlu0 %v1025
        %v1027 = vpop.xlane.xlu0 %1026
        %v1028 = vsub.f32 %v1024, %v1027
        %v1029 = vmul.f32 %v1028, 1.442695
        %v1030 = vpow.pop %v1029
        %v1031 = vsel %vm634, %v1030, 0.0
        %1032 = vadd.xlane.f32.xlu0 %v1031
        %v1033 = vpop.xlane.xlu0 %1032
        %v1034 = vrcp.pop %v1033
        %v1035 = vmul.f32 %v1030, %v1034
        %v1036 = vperm.slane %v1035, 0
        %v1037 = vlaneseq
        %v1038 = vshrl.u32 %v1037, 7
        %1040 = vset.pattern.permute.xlu0 %v1038
        %1041 = vperm.xlu0 %1040, %v1036
        %v1042 = vpop.permute.xlu0 %1041
        %v1043 = vperm.slane %v1035, 1
        %v1044 = vlaneseq
        %v1045 = vshrl.u32 %v1044, 7
        %1047 = vset.pattern.permute.xlu0 %v1045
        %1048 = vperm.xlu0 %1047, %v1043
        %v1049 = vpop.permute.xlu0 %1048
        %v1050 = vperm.slane %v1035, 2
        %v1051 = vlaneseq
        %v1052 = vshrl.u32 %v1051, 7
        %1054 = vset.pattern.permute.xlu0 %v1052
        %1055 = vperm.xlu0 %1054, %v1050
        %v1056 = vpop.permute.xlu0 %1055
        %v1057 = vperm.slane %v1035, 3
        %v1058 = vlaneseq
        %v1059 = vshrl.u32 %v1058, 7
        %1061 = vset.pattern.permute.xlu0 %v1059
        %1062 = vperm.xlu0 %1061, %v1057
        %v1063 = vpop.permute.xlu0 %1062
        %v1064 = vperm.slane %v1035, 4
        %v1065 = vlaneseq
        %v1066 = vshrl.u32 %v1065, 7
        %1068 = vset.pattern.permute.xlu0 %v1066
        %1069 = vperm.xlu0 %1068, %v1064
        %v1070 = vpop.permute.xlu0 %1069
        %v1071 = vperm.slane %v1035, 5
        %v1072 = vlaneseq
        %v1073 = vshrl.u32 %v1072, 7
        %1075 = vset.pattern.permute.xlu0 %v1073
        %1076 = vperm.xlu0 %1075, %v1071
        %v1077 = vpop.permute.xlu0 %1076
        %v1078 = vperm.slane %v1035, 6
        %v1079 = vlaneseq
        %v1080 = vshrl.u32 %v1079, 7
        %1082 = vset.pattern.permute.xlu0 %v1080
        %1083 = vperm.xlu0 %1082, %v1078
        %v1084 = vpop.permute.xlu0 %1083
        %v1085 = vperm.slane %v1035, 7
        %v1086 = vlaneseq
        %v1087 = vshrl.u32 %v1086, 7
        %1089 = vset.pattern.permute.xlu0 %v1087
        %1090 = vperm.xlu0 %1089, %v1085
        %v1091 = vpop.permute.xlu0 %1090
        %v1092 = vmul.f32 %v1042, %v625
        %v1093 = vmul.f32 %v1049, %v626
        %v1094 = vmul.f32 %v1056, %v627
        %v1095 = vmul.f32 %v1063, %v628
        %v1096 = vmul.f32 %v1070, %v629
        %v1097 = vmul.f32 %v1077, %v630
        %v1098 = vmul.f32 %v1084, %v631
        %v1099 = vmul.f32 %v1091, %v632
        %v1100 = vrot.slane %v1092, 4
        %v1101 = vadd.f32 %v1092, %v1100
        %v1102 = vrot.slane %v1101, 2
        %v1103 = vadd.f32 %v1101, %v1102
        %v1104 = vrot.slane %v1103, 1
        %v1105 = vadd.f32 %v1103, %v1104
        %v1106 = vrot.slane %v1093, 4
        %v1107 = vadd.f32 %v1093, %v1106
        %v1108 = vrot.slane %v1107, 2
        %v1109 = vadd.f32 %v1107, %v1108
        %v1110 = vrot.slane %v1109, 1
        %v1111 = vadd.f32 %v1109, %v1110
        %v1112 = vrot.slane %v1094, 4
        %v1113 = vadd.f32 %v1094, %v1112
        %v1114 = vrot.slane %v1113, 2
        %v1115 = vadd.f32 %v1113, %v1114
        %v1116 = vrot.slane %v1115, 1
        %v1117 = vadd.f32 %v1115, %v1116
        %v1118 = vrot.slane %v1095, 4
        %v1119 = vadd.f32 %v1095, %v1118
        %v1120 = vrot.slane %v1119, 2
        %v1121 = vadd.f32 %v1119, %v1120
        %v1122 = vrot.slane %v1121, 1
        %v1123 = vadd.f32 %v1121, %v1122
        %v1124 = vrot.slane %v1096, 4
        %v1125 = vadd.f32 %v1096, %v1124
        %v1126 = vrot.slane %v1125, 2
        %v1127 = vadd.f32 %v1125, %v1126
        %v1128 = vrot.slane %v1127, 1
        %v1129 = vadd.f32 %v1127, %v1128
        %v1130 = vrot.slane %v1097, 4
        %v1131 = vadd.f32 %v1097, %v1130
        %v1132 = vrot.slane %v1131, 2
        %v1133 = vadd.f32 %v1131, %v1132
        %v1134 = vrot.slane %v1133, 1
        %v1135 = vadd.f32 %v1133, %v1134
        %v1136 = vrot.slane %v1098, 4
        %v1137 = vadd.f32 %v1098, %v1136
        %v1138 = vrot.slane %v1137, 2
        %v1139 = vadd.f32 %v1137, %v1138
        %v1140 = vrot.slane %v1139, 1
        %v1141 = vadd.f32 %v1139, %v1140
        %v1142 = vrot.slane %v1099, 4
        %v1143 = vadd.f32 %v1099, %v1142
        %v1144 = vrot.slane %v1143, 2
        %v1145 = vadd.f32 %v1143, %v1144
        %v1146 = vrot.slane %v1145, 1
        %v1147 = vadd.f32 %v1145, %v1146
        %v1156 = vsel %vm726, %v1111, %v1105
        %v1157 = vsel %vm728, %v1117, %v1156
        %v1158 = vsel %vm730, %v1123, %v1157
        %v1159 = vsel %vm732, %v1129, %v1158
        %v1160 = vsel %vm734, %v1135, %v1159
        %v1161 = vsel %vm736, %v1141, %v1160
        %v1162 = vsel %vm738, %v1147, %v1161
        %1180 = vrot.lane.b32.xlu0 %v866, 120
        %v1181 = vpop.permute.xlu0 %1180
        %1182 = vrot.lane.b32.xlu0 %v867, 120
        %v1183 = vpop.permute.xlu0 %1182
        %1184 = vrot.lane.b32.xlu0 %v868, 120
        %v1185 = vpop.permute.xlu0 %1184
        %1186 = vrot.lane.b32.xlu0 %v869, 120
        %v1187 = vpop.permute.xlu0 %1186
        %1188 = vrot.lane.b32.xlu0 %v870, 120
        %v1189 = vpop.permute.xlu0 %1188
        %1190 = vrot.lane.b32.xlu0 %v871, 120
        %v1191 = vpop.permute.xlu0 %1190
        %1192 = vrot.lane.b32.xlu0 %v872, 120
        %v1193 = vpop.permute.xlu0 %1192
        %1194 = vrot.lane.b32.xlu0 %v873, 120
        %v1195 = vpop.permute.xlu0 %1194
        %1196 = vrot.lane.b32.xlu0 %v874, 120
        %v1197 = vpop.permute.xlu0 %1196
        %1198 = vrot.lane.b32.xlu0 %v875, 120
        %v1199 = vpop.permute.xlu0 %1198
        %1200 = vrot.lane.b32.xlu0 %v876, 120
        %v1201 = vpop.permute.xlu0 %1200
        %1202 = vrot.lane.b32.xlu0 %v877, 120
        %v1203 = vpop.permute.xlu0 %1202
        %1204 = vrot.lane.b32.xlu0 %v878, 120
        %v1205 = vpop.permute.xlu0 %1204
        %1206 = vrot.lane.b32.xlu0 %v879, 120
        %v1207 = vpop.permute.xlu0 %1206
        %1208 = vrot.lane.b32.xlu0 %v880, 120
        %v1209 = vpop.permute.xlu0 %1208
        %1210 = vrot.lane.b32.xlu0 %v881, 120
        %v1211 = vpop.permute.xlu0 %1210
        %1228 = vmatpush.msra.mxu0 %v1211
        %1229 = vmatpush.msra.mxu0 %v1209
        %1230 = vmatpush.msra.mxu0 %v1207
        %1231 = vmatpush.msra.mxu0 %v1205
        %1232 = vmatpush.msra.mxu0 %v1203
        %1233 = vmatpush.msra.mxu0 %v1201
        %1234 = vmatpush.msra.mxu0 %v1199
        %1235 = vmatpush.msra.mxu0 %v1197
        %1236 = vmatpush.msra.mxu0 %v1195
        %1237 = vmatpush.msra.mxu0 %v1193
        %1238 = vmatpush.msra.mxu0 %v1191
        %1239 = vmatpush.msra.mxu0 %v1189
        %1240 = vmatpush.msra.mxu0 %v1187
        %1241 = vmatpush.msra.mxu0 %v1185
        %1242 = vmatpush.msra.mxu0 %v1183
        %1243 = vmatpush.msra.mxu0 %v1181
        %1244 = vmatmul.f32.gmra.mxu0 %v1162
        %v1245 = vpop.f32.mrf.mxu0
        %v1246 = vadd.f32 0.0, %v1245
        %1247 = vdwg.mxu0
        %1249 = vrot.lane.b32.xlu0 %v1246, 8
        %v1250 = vpop.permute.xlu0 %1249
        %v1252 = vadd.f32 %v548, %v1250
        %v1253 = vld [vmem:[%s7 + $0x10] sm:$0xff]
        %1254 = vrot.lane.b32.xlu0 %v492, 112
        %v1255 = vpop.permute.xlu0 %1254
        %v1256 = vsel %vm634, %v1255, 0
        %1258 = vmatpush.msra.mxu0 0.0
        %1259 = vmatpush.msra.mxu0 0.0
        %1260 = vmatpush.msra.mxu0 0.0
        %1261 = vmatpush.msra.mxu0 0.0
        %1262 = vmatpush.msra.mxu0 0.0
        %1263 = vmatpush.msra.mxu0 0.0
        %1264 = vmatpush.msra.mxu0 0.0
        %1265 = vmatpush.msra.mxu0 0.0
        %1266 = vmatpush.msra.mxu0 0.0
        %1267 = vmatpush.msra.mxu0 0.0
        %1268 = vmatpush.msra.mxu0 0.0
        %1269 = vmatpush.msra.mxu0 0.0
        %1270 = vmatpush.msra.mxu0 0.0
        %1271 = vmatpush.msra.mxu0 0.0
        %1272 = vmatpush.msra.mxu0 0.0
        %1273 = vmatpush.msra.mxu0 %v1253
        %1274 = vmatmul.f32.gmra.mxu0 %v1256
        %v1275 = vpop.f32.mrf.mxu0
        %v1276 = vadd.f32 0.0, %v1275
        %1277 = vdwg.mxu0
        %1278 = vrot.lane.b32.xlu0 %v658, 112
        %v1279 = vpop.permute.xlu0 %1278
        %v1281 = vsel %vm634, %v1279, 0.0
        %1282 = vadd.xlane.f32.xlu0 %v1281
        %v1283 = vpop.xlane.xlu0 %1282
        %v1285 = vrot.slane %v1276, 1
        %v1286 = vrot.slane %v1276, 2
        %v1287 = vrot.slane %v1276, 3
        %v1288 = vrot.slane %v1276, 4
        %v1289 = vrot.slane %v1276, 5
        %v1290 = vrot.slane %v1276, 6
        %v1291 = vrot.slane %v1276, 7
        %v1292 = vperm.slane %v1276, 0
        %v1293 = vperm.slane %v1285, 0
        %v1294 = vperm.slane %v1286, 0
        %v1295 = vperm.slane %v1287, 0
        %v1296 = vperm.slane %v1288, 0
        %v1297 = vperm.slane %v1289, 0
        %v1298 = vperm.slane %v1290, 0
        %v1299 = vperm.slane %v1291, 0
        %v1308 = vmul.f32 %v1292, %v625
        %v1309 = vmul.f32 %v1293, %v626
        %v1310 = vmul.f32 %v1294, %v627
        %v1311 = vmul.f32 %v1295, %v628
        %v1312 = vmul.f32 %v1296, %v629
        %v1313 = vmul.f32 %v1297, %v630
        %v1314 = vmul.f32 %v1298, %v631
        %v1315 = vmul.f32 %v1299, %v632
        %1316 = vadd.xlane.f32.xlu0 %v1308
        %v1317 = vpop.xlane.xlu0 %1316
        %1318 = vadd.xlane.f32.xlu0 %v1309
        %v1319 = vpop.xlane.xlu0 %1318
        %1320 = vadd.xlane.f32.xlu0 %v1310
        %v1321 = vpop.xlane.xlu0 %1320
        %1322 = vadd.xlane.f32.xlu0 %v1311
        %v1323 = vpop.xlane.xlu0 %1322
        %1324 = vadd.xlane.f32.xlu0 %v1312
        %v1325 = vpop.xlane.xlu0 %1324
        %1326 = vadd.xlane.f32.xlu0 %v1313
        %v1327 = vpop.xlane.xlu0 %1326
        %1328 = vadd.xlane.f32.xlu0 %v1314
        %v1329 = vpop.xlane.xlu0 %1328
        %1330 = vadd.xlane.f32.xlu0 %v1315
        %v1331 = vpop.xlane.xlu0 %1330
        %v1340 = vperm.slane %v1317, %v552
        %v1341 = vperm.slane %v1319, %v552
        %v1342 = vperm.slane %v1321, %v552
        %v1343 = vperm.slane %v1323, %v552
        %v1344 = vperm.slane %v1325, %v552
        %v1345 = vperm.slane %v1327, %v552
        %v1346 = vperm.slane %v1329, %v552
        %v1347 = vperm.slane %v1331, %v552
        %v1348 = vsel %vm726, %v1341, %v1340
        %v1349 = vsel %vm728, %v1342, %v1348
        %v1350 = vsel %vm730, %v1343, %v1349
        %v1351 = vsel %vm732, %v1344, %v1350
        %v1352 = vsel %vm734, %v1345, %v1351
        %v1353 = vsel %vm736, %v1346, %v1352
        %v1354 = vsel %vm738, %v1347, %v1353
        %v1356 = vadd.f32 %v1283, %v1354
        %v1357 = vmul.f32 %v1356, 0.35355338
        %v1358 = vsel %vm634, %v1357, -inf
        %1359 = vmax.xlane.f32.xlu0 %v1358
        %v1360 = vpop.xlane.xlu0 %1359
        %v1361 = vsub.f32 %v1357, %v1360
        %v1362 = vmul.f32 %v1361, 1.442695
        %v1363 = vpow.pop %v1362
        %v1364 = vsel %vm634, %v1363, 0.0
        %1365 = vadd.xlane.f32.xlu0 %v1364
        %v1366 = vpop.xlane.xlu0 %1365
        %v1367 = vrcp.pop %v1366
        %v1368 = vmul.f32 %v1363, %v1367
        %v1369 = vperm.slane %v1368, 0
        %v1370 = vlaneseq
        %v1371 = vshrl.u32 %v1370, 7
        %1373 = vset.pattern.permute.xlu0 %v1371
        %1374 = vperm.xlu0 %1373, %v1369
        %v1375 = vpop.permute.xlu0 %1374
        %v1376 = vperm.slane %v1368, 1
        %v1377 = vlaneseq
        %v1378 = vshrl.u32 %v1377, 7
        %1380 = vset.pattern.permute.xlu0 %v1378
        %1381 = vperm.xlu0 %1380, %v1376
        %v1382 = vpop.permute.xlu0 %1381
        %v1383 = vperm.slane %v1368, 2
        %v1384 = vlaneseq
        %v1385 = vshrl.u32 %v1384, 7
        %1387 = vset.pattern.permute.xlu0 %v1385
        %1388 = vperm.xlu0 %1387, %v1383
        %v1389 = vpop.permute.xlu0 %1388
        %v1390 = vperm.slane %v1368, 3
        %v1391 = vlaneseq
        %v1392 = vshrl.u32 %v1391, 7
        %1394 = vset.pattern.permute.xlu0 %v1392
        %1395 = vperm.xlu0 %1394, %v1390
        %v1396 = vpop.permute.xlu0 %1395
        %v1397 = vperm.slane %v1368, 4
        %v1398 = vlaneseq
        %v1399 = vshrl.u32 %v1398, 7
        %1401 = vset.pattern.permute.xlu0 %v1399
        %1402 = vperm.xlu0 %1401, %v1397
        %v1403 = vpop.permute.xlu0 %1402
        %v1404 = vperm.slane %v1368, 5
        %v1405 = vlaneseq
        %v1406 = vshrl.u32 %v1405, 7
        %1408 = vset.pattern.permute.xlu0 %v1406
        %1409 = vperm.xlu0 %1408, %v1404
        %v1410 = vpop.permute.xlu0 %1409
        %v1411 = vperm.slane %v1368, 6
        %v1412 = vlaneseq
        %v1413 = vshrl.u32 %v1412, 7
        %1415 = vset.pattern.permute.xlu0 %v1413
        %1416 = vperm.xlu0 %1415, %v1411
        %v1417 = vpop.permute.xlu0 %1416
        %v1418 = vperm.slane %v1368, 7
        %v1419 = vlaneseq
        %v1420 = vshrl.u32 %v1419, 7
        %1422 = vset.pattern.permute.xlu0 %v1420
        %1423 = vperm.xlu0 %1422, %v1418
        %v1424 = vpop.permute.xlu0 %1423
        %v1425 = vmul.f32 %v1375, %v625
        %v1426 = vmul.f32 %v1382, %v626
        %v1427 = vmul.f32 %v1389, %v627
        %v1428 = vmul.f32 %v1396, %v628
        %v1429 = vmul.f32 %v1403, %v629
        %v1430 = vmul.f32 %v1410, %v630
        %v1431 = vmul.f32 %v1417, %v631
        %v1432 = vmul.f32 %v1424, %v632
        %v1433 = vrot.slane %v1425, 4
        %v1434 = vadd.f32 %v1425, %v1433
        %v1435 = vrot.slane %v1434, 2
        %v1436 = vadd.f32 %v1434, %v1435
        %v1437 = vrot.slane %v1436, 1
        %v1438 = vadd.f32 %v1436, %v1437
        %v1439 = vrot.slane %v1426, 4
        %v1440 = vadd.f32 %v1426, %v1439
        %v1441 = vrot.slane %v1440, 2
        %v1442 = vadd.f32 %v1440, %v1441
        %v1443 = vrot.slane %v1442, 1
        %v1444 = vadd.f32 %v1442, %v1443
        %v1445 = vrot.slane %v1427, 4
        %v1446 = vadd.f32 %v1427, %v1445
        %v1447 = vrot.slane %v1446, 2
        %v1448 = vadd.f32 %v1446, %v1447
        %v1449 = vrot.slane %v1448, 1
        %v1450 = vadd.f32 %v1448, %v1449
        %v1451 = vrot.slane %v1428, 4
        %v1452 = vadd.f32 %v1428, %v1451
        %v1453 = vrot.slane %v1452, 2
        %v1454 = vadd.f32 %v1452, %v1453
        %v1455 = vrot.slane %v1454, 1
        %v1456 = vadd.f32 %v1454, %v1455
        %v1457 = vrot.slane %v1429, 4
        %v1458 = vadd.f32 %v1429, %v1457
        %v1459 = vrot.slane %v1458, 2
        %v1460 = vadd.f32 %v1458, %v1459
        %v1461 = vrot.slane %v1460, 1
        %v1462 = vadd.f32 %v1460, %v1461
        %v1463 = vrot.slane %v1430, 4
        %v1464 = vadd.f32 %v1430, %v1463
        %v1465 = vrot.slane %v1464, 2
        %v1466 = vadd.f32 %v1464, %v1465
        %v1467 = vrot.slane %v1466, 1
        %v1468 = vadd.f32 %v1466, %v1467
        %v1469 = vrot.slane %v1431, 4
        %v1470 = vadd.f32 %v1431, %v1469
        %v1471 = vrot.slane %v1470, 2
        %v1472 = vadd.f32 %v1470, %v1471
        %v1473 = vrot.slane %v1472, 1
        %v1474 = vadd.f32 %v1472, %v1473
        %v1475 = vrot.slane %v1432, 4
        %v1476 = vadd.f32 %v1432, %v1475
        %v1477 = vrot.slane %v1476, 2
        %v1478 = vadd.f32 %v1476, %v1477
        %v1479 = vrot.slane %v1478, 1
        %v1480 = vadd.f32 %v1478, %v1479
        %v1489 = vsel %vm726, %v1444, %v1438
        %v1490 = vsel %vm728, %v1450, %v1489
        %v1491 = vsel %vm730, %v1456, %v1490
        %v1492 = vsel %vm732, %v1462, %v1491
        %v1493 = vsel %vm734, %v1468, %v1492
        %v1494 = vsel %vm736, %v1474, %v1493
        %v1495 = vsel %vm738, %v1480, %v1494
        %1497 = vrot.lane.b32.xlu0 %v866, 112
        %v1498 = vpop.permute.xlu0 %1497
        %1499 = vrot.lane.b32.xlu0 %v867, 112
        %v1500 = vpop.permute.xlu0 %1499
        %1501 = vrot.lane.b32.xlu0 %v868, 112
        %v1502 = vpop.permute.xlu0 %1501
        %1503 = vrot.lane.b32.xlu0 %v869, 112
        %v1504 = vpop.permute.xlu0 %1503
        %1505 = vrot.lane.b32.xlu0 %v870, 112
        %v1506 = vpop.permute.xlu0 %1505
        %1507 = vrot.lane.b32.xlu0 %v871, 112
        %v1508 = vpop.permute.xlu0 %1507
        %1509 = vrot.lane.b32.xlu0 %v872, 112
        %v1510 = vpop.permute.xlu0 %1509
        %1511 = vrot.lane.b32.xlu0 %v873, 112
        %v1512 = vpop.permute.xlu0 %1511
        %1513 = vrot.lane.b32.xlu0 %v874, 112
        %v1514 = vpop.permute.xlu0 %1513
        %1515 = vrot.lane.b32.xlu0 %v875, 112
        %v1516 = vpop.permute.xlu0 %1515
        %1517 = vrot.lane.b32.xlu0 %v876, 112
        %v1518 = vpop.permute.xlu0 %1517
        %1519 = vrot.lane.b32.xlu0 %v877, 112
        %v1520 = vpop.permute.xlu0 %1519
        %1521 = vrot.lane.b32.xlu0 %v878, 112
        %v1522 = vpop.permute.xlu0 %1521
        %1523 = vrot.lane.b32.xlu0 %v879, 112
        %v1524 = vpop.permute.xlu0 %1523
        %1525 = vrot.lane.b32.xlu0 %v880, 112
        %v1526 = vpop.permute.xlu0 %1525
        %1527 = vrot.lane.b32.xlu0 %v881, 112
        %v1528 = vpop.permute.xlu0 %1527
        %1545 = vmatpush.msra.mxu0 %v1528
        %1546 = vmatpush.msra.mxu0 %v1526
        %1547 = vmatpush.msra.mxu0 %v1524
        %1548 = vmatpush.msra.mxu0 %v1522
        %1549 = vmatpush.msra.mxu0 %v1520
        %1550 = vmatpush.msra.mxu0 %v1518
        %1551 = vmatpush.msra.mxu0 %v1516
        %1552 = vmatpush.msra.mxu0 %v1514
        %1553 = vmatpush.msra.mxu0 %v1512
        %1554 = vmatpush.msra.mxu0 %v1510
        %1555 = vmatpush.msra.mxu0 %v1508
        %1556 = vmatpush.msra.mxu0 %v1506
        %1557 = vmatpush.msra.mxu0 %v1504
        %1558 = vmatpush.msra.mxu0 %v1502
        %1559 = vmatpush.msra.mxu0 %v1500
        %1560 = vmatpush.msra.mxu0 %v1498
        %1561 = vmatmul.f32.gmra.mxu0 %v1495
        %v1562 = vpop.f32.mrf.mxu0
        %v1563 = vadd.f32 0.0, %v1562
        %1564 = vdwg.mxu0
        %1566 = vrot.lane.b32.xlu0 %v1563, 16
        %v1567 = vpop.permute.xlu0 %1566
        %v1569 = vadd.f32 %v548, %v1567
        %v1570 = vld [vmem:[%s7 + $0x18] sm:$0xff]
        %1571 = vrot.lane.b32.xlu0 %v492, 104
        %v1572 = vpop.permute.xlu0 %1571
        %v1573 = vsel %vm634, %v1572, 0
        %1575 = vmatpush.msra.mxu0 0.0
        %1576 = vmatpush.msra.mxu0 0.0
        %1577 = vmatpush.msra.mxu0 0.0
        %1578 = vmatpush.msra.mxu0 0.0
        %1579 = vmatpush.msra.mxu0 0.0
        %1580 = vmatpush.msra.mxu0 0.0
        %1581 = vmatpush.msra.mxu0 0.0
        %1582 = vmatpush.msra.mxu0 0.0
        %1583 = vmatpush.msra.mxu0 0.0
        %1584 = vmatpush.msra.mxu0 0.0
        %1585 = vmatpush.msra.mxu0 0.0
        %1586 = vmatpush.msra.mxu0 0.0
        %1587 = vmatpush.msra.mxu0 0.0
        %1588 = vmatpush.msra.mxu0 0.0
        %1589 = vmatpush.msra.mxu0 0.0
        %1590 = vmatpush.msra.mxu0 %v1570
        %1591 = vmatmul.f32.gmra.mxu0 %v1573
        %v1592 = vpop.f32.mrf.mxu0
        %v1593 = vadd.f32 0.0, %v1592
        %1594 = vdwg.mxu0
        %1595 = vrot.lane.b32.xlu0 %v658, 104
        %v1596 = vpop.permute.xlu0 %1595
        %v1598 = vsel %vm634, %v1596, 0.0
        %1599 = vadd.xlane.f32.xlu0 %v1598
        %v1600 = vpop.xlane.xlu0 %1599
        %v1602 = vrot.slane %v1593, 1
        %v1603 = vrot.slane %v1593, 2
        %v1604 = vrot.slane %v1593, 3
        %v1605 = vrot.slane %v1593, 4
        %v1606 = vrot.slane %v1593, 5
        %v1607 = vrot.slane %v1593, 6
        %v1608 = vrot.slane %v1593, 7
        %v1609 = vperm.slane %v1593, 0
        %v1610 = vperm.slane %v1602, 0
        %v1611 = vperm.slane %v1603, 0
        %v1612 = vperm.slane %v1604, 0
        %v1613 = vperm.slane %v1605, 0
        %v1614 = vperm.slane %v1606, 0
        %v1615 = vperm.slane %v1607, 0
        %v1616 = vperm.slane %v1608, 0
        %v1625 = vmul.f32 %v1609, %v625
        %v1626 = vmul.f32 %v1610, %v626
        %v1627 = vmul.f32 %v1611, %v627
        %v1628 = vmul.f32 %v1612, %v628
        %v1629 = vmul.f32 %v1613, %v629
        %v1630 = vmul.f32 %v1614, %v630
        %v1631 = vmul.f32 %v1615, %v631
        %v1632 = vmul.f32 %v1616, %v632
        %1633 = vadd.xlane.f32.xlu0 %v1625
        %v1634 = vpop.xlane.xlu0 %1633
        %1635 = vadd.xlane.f32.xlu0 %v1626
        %v1636 = vpop.xlane.xlu0 %1635
        %1637 = vadd.xlane.f32.xlu0 %v1627
        %v1638 = vpop.xlane.xlu0 %1637
        %1639 = vadd.xlane.f32.xlu0 %v1628
        %v1640 = vpop.xlane.xlu0 %1639
        %1641 = vadd.xlane.f32.xlu0 %v1629
        %v1642 = vpop.xlane.xlu0 %1641
        %1643 = vadd.xlane.f32.xlu0 %v1630
        %v1644 = vpop.xlane.xlu0 %1643
        %1645 = vadd.xlane.f32.xlu0 %v1631
        %v1646 = vpop.xlane.xlu0 %1645
        %1647 = vadd.xlane.f32.xlu0 %v1632
        %v1648 = vpop.xlane.xlu0 %1647
        %v1657 = vperm.slane %v1634, %v552
        %v1658 = vperm.slane %v1636, %v552
        %v1659 = vperm.slane %v1638, %v552
        %v1660 = vperm.slane %v1640, %v552
        %v1661 = vperm.slane %v1642, %v552
        %v1662 = vperm.slane %v1644, %v552
        %v1663 = vperm.slane %v1646, %v552
        %v1664 = vperm.slane %v1648, %v552
        %v1665 = vsel %vm726, %v1658, %v1657
        %v1666 = vsel %vm728, %v1659, %v1665
        %v1667 = vsel %vm730, %v1660, %v1666
        %v1668 = vsel %vm732, %v1661, %v1667
        %v1669 = vsel %vm734, %v1662, %v1668
        %v1670 = vsel %vm736, %v1663, %v1669
        %v1671 = vsel %vm738, %v1664, %v1670
        %v1673 = vadd.f32 %v1600, %v1671
        %v1674 = vmul.f32 %v1673, 0.35355338
        %v1675 = vsel %vm634, %v1674, -inf
        %1676 = vmax.xlane.f32.xlu0 %v1675
        %v1677 = vpop.xlane.xlu0 %1676
        %v1678 = vsub.f32 %v1674, %v1677
        %v1679 = vmul.f32 %v1678, 1.442695
        %v1680 = vpow.pop %v1679
        %v1681 = vsel %vm634, %v1680, 0.0
        %1682 = vadd.xlane.f32.xlu0 %v1681
        %v1683 = vpop.xlane.xlu0 %1682
        %v1684 = vrcp.pop %v1683
        %v1685 = vmul.f32 %v1680, %v1684
        %v1686 = vperm.slane %v1685, 0
        %v1687 = vlaneseq
        %v1688 = vshrl.u32 %v1687, 7
        %1690 = vset.pattern.permute.xlu0 %v1688
        %1691 = vperm.xlu0 %1690, %v1686
        %v1692 = vpop.permute.xlu0 %1691
        %v1693 = vperm.slane %v1685, 1
        %v1694 = vlaneseq
        %v1695 = vshrl.u32 %v1694, 7
        %1697 = vset.pattern.permute.xlu0 %v1695
        %1698 = vperm.xlu0 %1697, %v1693
        %v1699 = vpop.permute.xlu0 %1698
        %v1700 = vperm.slane %v1685, 2
        %v1701 = vlaneseq
        %v1702 = vshrl.u32 %v1701, 7
        %1704 = vset.pattern.permute.xlu0 %v1702
        %1705 = vperm.xlu0 %1704, %v1700
        %v1706 = vpop.permute.xlu0 %1705
        %v1707 = vperm.slane %v1685, 3
        %v1708 = vlaneseq
        %v1709 = vshrl.u32 %v1708, 7
        %1711 = vset.pattern.permute.xlu0 %v1709
        %1712 = vperm.xlu0 %1711, %v1707
        %v1713 = vpop.permute.xlu0 %1712
        %v1714 = vperm.slane %v1685, 4
        %v1715 = vlaneseq
        %v1716 = vshrl.u32 %v1715, 7
        %1718 = vset.pattern.permute.xlu0 %v1716
        %1719 = vperm.xlu0 %1718, %v1714
        %v1720 = vpop.permute.xlu0 %1719
        %v1721 = vperm.slane %v1685, 5
        %v1722 = vlaneseq
        %v1723 = vshrl.u32 %v1722, 7
        %1725 = vset.pattern.permute.xlu0 %v1723
        %1726 = vperm.xlu0 %1725, %v1721
        %v1727 = vpop.permute.xlu0 %1726
        %v1728 = vperm.slane %v1685, 6
        %v1729 = vlaneseq
        %v1730 = vshrl.u32 %v1729, 7
        %1732 = vset.pattern.permute.xlu0 %v1730
        %1733 = vperm.xlu0 %1732, %v1728
        %v1734 = vpop.permute.xlu0 %1733
        %v1735 = vperm.slane %v1685, 7
        %v1736 = vlaneseq
        %v1737 = vshrl.u32 %v1736, 7
        %1739 = vset.pattern.permute.xlu0 %v1737
        %1740 = vperm.xlu0 %1739, %v1735
        %v1741 = vpop.permute.xlu0 %1740
        %v1742 = vmul.f32 %v1692, %v625
        %v1743 = vmul.f32 %v1699, %v626
        %v1744 = vmul.f32 %v1706, %v627
        %v1745 = vmul.f32 %v1713, %v628
        %v1746 = vmul.f32 %v1720, %v629
        %v1747 = vmul.f32 %v1727, %v630
        %v1748 = vmul.f32 %v1734, %v631
        %v1749 = vmul.f32 %v1741, %v632
        %v1750 = vrot.slane %v1742, 4
        %v1751 = vadd.f32 %v1742, %v1750
        %v1752 = vrot.slane %v1751, 2
        %v1753 = vadd.f32 %v1751, %v1752
        %v1754 = vrot.slane %v1753, 1
        %v1755 = vadd.f32 %v1753, %v1754
        %v1756 = vrot.slane %v1743, 4
        %v1757 = vadd.f32 %v1743, %v1756
        %v1758 = vrot.slane %v1757, 2
        %v1759 = vadd.f32 %v1757, %v1758
        %v1760 = vrot.slane %v1759, 1
        %v1761 = vadd.f32 %v1759, %v1760
        %v1762 = vrot.slane %v1744, 4
        %v1763 = vadd.f32 %v1744, %v1762
        %v1764 = vrot.slane %v1763, 2
        %v1765 = vadd.f32 %v1763, %v1764
        %v1766 = vrot.slane %v1765, 1
        %v1767 = vadd.f32 %v1765, %v1766
        %v1768 = vrot.slane %v1745, 4
        %v1769 = vadd.f32 %v1745, %v1768
        %v1770 = vrot.slane %v1769, 2
        %v1771 = vadd.f32 %v1769, %v1770
        %v1772 = vrot.slane %v1771, 1
        %v1773 = vadd.f32 %v1771, %v1772
        %v1774 = vrot.slane %v1746, 4
        %v1775 = vadd.f32 %v1746, %v1774
        %v1776 = vrot.slane %v1775, 2
        %v1777 = vadd.f32 %v1775, %v1776
        %v1778 = vrot.slane %v1777, 1
        %v1779 = vadd.f32 %v1777, %v1778
        %v1780 = vrot.slane %v1747, 4
        %v1781 = vadd.f32 %v1747, %v1780
        %v1782 = vrot.slane %v1781, 2
        %v1783 = vadd.f32 %v1781, %v1782
        %v1784 = vrot.slane %v1783, 1
        %v1785 = vadd.f32 %v1783, %v1784
        %v1786 = vrot.slane %v1748, 4
        %v1787 = vadd.f32 %v1748, %v1786
        %v1788 = vrot.slane %v1787, 2
        %v1789 = vadd.f32 %v1787, %v1788
        %v1790 = vrot.slane %v1789, 1
        %v1791 = vadd.f32 %v1789, %v1790
        %v1792 = vrot.slane %v1749, 4
        %v1793 = vadd.f32 %v1749, %v1792
        %v1794 = vrot.slane %v1793, 2
        %v1795 = vadd.f32 %v1793, %v1794
        %v1796 = vrot.slane %v1795, 1
        %v1797 = vadd.f32 %v1795, %v1796
        %v1806 = vsel %vm726, %v1761, %v1755
        %v1807 = vsel %vm728, %v1767, %v1806
        %v1808 = vsel %vm730, %v1773, %v1807
        %v1809 = vsel %vm732, %v1779, %v1808
        %v1810 = vsel %vm734, %v1785, %v1809
        %v1811 = vsel %vm736, %v1791, %v1810
        %v1812 = vsel %vm738, %v1797, %v1811
        %1814 = vrot.lane.b32.xlu0 %v866, 104
        %v1815 = vpop.permute.xlu0 %1814
        %1816 = vrot.lane.b32.xlu0 %v867, 104
        %v1817 = vpop.permute.xlu0 %1816
        %1818 = vrot.lane.b32.xlu0 %v868, 104
        %v1819 = vpop.permute.xlu0 %1818
        %1820 = vrot.lane.b32.xlu0 %v869, 104
        %v1821 = vpop.permute.xlu0 %1820
        %1822 = vrot.lane.b32.xlu0 %v870, 104
        %v1823 = vpop.permute.xlu0 %1822
        %1824 = vrot.lane.b32.xlu0 %v871, 104
        %v1825 = vpop.permute.xlu0 %1824
        %1826 = vrot.lane.b32.xlu0 %v872, 104
        %v1827 = vpop.permute.xlu0 %1826
        %1828 = vrot.lane.b32.xlu0 %v873, 104
        %v1829 = vpop.permute.xlu0 %1828
        %1830 = vrot.lane.b32.xlu0 %v874, 104
        %v1831 = vpop.permute.xlu0 %1830
        %1832 = vrot.lane.b32.xlu0 %v875, 104
        %v1833 = vpop.permute.xlu0 %1832
        %1834 = vrot.lane.b32.xlu0 %v876, 104
        %v1835 = vpop.permute.xlu0 %1834
        %1836 = vrot.lane.b32.xlu0 %v877, 104
        %v1837 = vpop.permute.xlu0 %1836
        %1838 = vrot.lane.b32.xlu0 %v878, 104
        %v1839 = vpop.permute.xlu0 %1838
        %1840 = vrot.lane.b32.xlu0 %v879, 104
        %v1841 = vpop.permute.xlu0 %1840
        %1842 = vrot.lane.b32.xlu0 %v880, 104
        %v1843 = vpop.permute.xlu0 %1842
        %1844 = vrot.lane.b32.xlu0 %v881, 104
        %v1845 = vpop.permute.xlu0 %1844
        %1862 = vmatpush.msra.mxu0 %v1845
        %1863 = vmatpush.msra.mxu0 %v1843
        %1864 = vmatpush.msra.mxu0 %v1841
        %1865 = vmatpush.msra.mxu0 %v1839
        %1866 = vmatpush.msra.mxu0 %v1837
        %1867 = vmatpush.msra.mxu0 %v1835
        %1868 = vmatpush.msra.mxu0 %v1833
        %1869 = vmatpush.msra.mxu0 %v1831
        %1870 = vmatpush.msra.mxu0 %v1829
        %1871 = vmatpush.msra.mxu0 %v1827
        %1872 = vmatpush.msra.mxu0 %v1825
        %1873 = vmatpush.msra.mxu0 %v1823
        %1874 = vmatpush.msra.mxu0 %v1821
        %1875 = vmatpush.msra.mxu0 %v1819
        %1876 = vmatpush.msra.mxu0 %v1817
        %1877 = vmatpush.msra.mxu0 %v1815
        %1878 = vmatmul.f32.gmra.mxu0 %v1812
        %v1879 = vpop.f32.mrf.mxu0
        %v1880 = vadd.f32 0.0, %v1879
        %1881 = vdwg.mxu0
        %1883 = vrot.lane.b32.xlu0 %v1880, 24
        %v1884 = vpop.permute.xlu0 %1883
        %v1886 = vadd.f32 %v548, %v1884
        %v1887 = vsel %vm634, %v918, %v1252
        %vm1888 = vcmask 130048
        %v1889 = vsel %vm1888, %v1887, %v1569
        %vm1890 = vcmask 195584
        %v1891 = vsel %vm1890, %v1889, %v1886
        %1892 = vst.msk [vmem:[%s450] sm:$0xff] %vm470, %v1891
        %s1893 = sand.u32 %s268, 1
        %s1894 = scalar_lea.sflag [#allocation4], %s1893
        %s1895 = sand.u32 %s268, 1
        %s1896 = smul.addr %s1895, 8
        %s1897 = scalar_lea.vmem [#allocation7], %s1896
        // Predicated region
        $region65: #{tpu_custom_call.1} parent=55 // pred_check
          %p1898 = pneg %p278
        $region66: #{tpu_custom_call.1} parent=55 // pred_check_branch
          %1900 = sbr.rel (%p1898) target = $region68
        $region67: #{tpu_custom_call.1} parent=55 // pred_region
          %1902 = vsyncadd %s1894, 0
          %s1903 = sadd.s32 %s34, %s33
          %s1904 = smul.addr %s1903, 8
          %s1905 = scalar_lea.hbm %s9, %s1904
          %s1907 = sshll.u32 %s1897, 4
          %s1908 = int_to_ptr.vmem [resolvable:$true] %s1907
          %s1909 = sshll.u32 %s1905, 4
          %s1910 = int_to_ptr.hbm [resolvable:$true] %s1909
          %1912 = dma.vmem_to_hbm [thread:$0]  %s1908, 128, %s1910, %s1894
        $region68: #{tpu_custom_call.1} parent=55 // pred_fallthru
          _
      $region56: #{tpu_custom_call.1} parent=5 // pred_fallthru
        _
      %p1913 = scmp.le.s32.totalorder 2, %s24
      // Predicated region
      $region69: #{tpu_custom_call.1} parent=5 // pred_check
        %p1914 = pneg %p1913
      $region70: #{tpu_custom_call.1} parent=5 // pred_check_branch
        %1916 = sbr.rel (%p1914) target = $region72
      $region71: #{tpu_custom_call.1} parent=5 // pred_region
        %s1917 = ssub.s32 %s24, 2
        // Predicated region
        $region73: #{tpu_custom_call.1} parent=71 // pred_check
          %p1918 = pneg %p284
        $region74: #{tpu_custom_call.1} parent=71 // pred_check_branch
          %1920 = sbr.rel (%p1918) target = $region76
        $region75: #{tpu_custom_call.1} parent=71 // pred_region
          %s1921 = sand.u32 %s269, 1
          %s1922 = scalar_lea.sflag [#allocation4], %s1921
          %s1923 = sand.u32 %s269, 1
          %s1924 = smul.addr %s1923, 8
          %s1925 = scalar_lea.vmem [#allocation7], %s1924
          %1927 = dma.done %s1922, 128
        $region76: #{tpu_custom_call.1} parent=71 // pred_fallthru
          _
      $region72: #{tpu_custom_call.1} parent=5 // pred_fallthru
        _
    $region6: #{tpu_custom_call.1} parent=1 // loop_footer
      %s28 = sadd.s32 1, %s24
    $region7: #{tpu_custom_call.1} parent=1 // loop_footer_branch
      %23 = sbr.rel target = $region3
    $region8: #{tpu_custom_call.1} parent=1 // loop_exit
      _
    %1928 = vsyncpa [#allocation3], 1
    %s1929 = scalar_lea.sflag [#allocation3], 1
    %1930 = vsyncpa %s1929, 1
    %1931 = vsyncpa [#allocation6], 1
    %s1932 = scalar_lea.sflag [#allocation6], 1
    %1933 = vsyncpa %s1932, 1
    %1934 = vsyncpa [#allocation4], 1
    %s1935 = scalar_lea.sflag [#allocation4], 1
    %1936 = vsyncpa %s1935, 1

</llo_original>
